<compile_context>
chip_gen: v7x
topology: tpu7x:2x2x1
jax: 0.10.0
libtpu: 0.0.40
codegen_flags: <defaults>
</compile_context>

<pallas_src>
import functools

import jax
import jax.numpy as jnp
from jax import lax
from jax.experimental import pallas as pl
from jax.experimental.pallas import tpu as pltpu

NEG_SLOPE = 0.01  # nn.LeakyReLU default negative slope


def _transconv_up_kernel(x_ref, g_ref, m_ref, b_ref, out_ref, xw_ref,
                         *, H, W, PAD, compute_dtype):
    # x_ref  : (1, Cin, H*W)       VMEM  -- NCHW input, spatial dims flattened onto lanes
    # g_ref  : (9, 4*Cout, Cin)    VMEM  -- pool-folded per-tap phase weights
    # m_ref  : (9, 1, H*W)         VMEM  -- per-tap {0,1} boundary masks
    # b_ref  : (2,)                SMEM  -- [bias1a, bias1b]
    # out_ref: (1, 4*Cout, H*W)    VMEM  -- phase-packed pooled + LeakyReLU output
    # xw_ref : (Cin, 2*PAD + H*W)  VMEM scratch -- x+bias1a at a 128-aligned offset,
    #                               zero borders model the transposed-conv boundary
    HW = H * W
    Cin = x_ref.shape[1]

    # Zero only the border strips (aligned stores); interior is fully overwritten below.
    zero_border = jnp.zeros((Cin, PAD), jnp.float32)
    xw_ref[:, :PAD] = zero_border
    xw_ref[:, PAD + HW:] = zero_border
    # bias1a fused into the (aligned, unmasked) interior store.
    xw_ref[:, PAD:PAD + HW] = x_ref[0] + b_ref[0]

    # 9 taps: spatial offset (rh-1, rw-1) == flat lane offset (rh-1)*W + (rw-1) into the
    # padded slab; positions whose source pixel wraps across an image row are zeroed by a
    # precomputed {0,1} mask (the h-boundary is already covered by the zero borders).
    # All tap matmuls accumulate in registers; the result is stored exactly once.
    acc = None
    for rh in range(3):
        for rw in range(3):
            t = rh * 3 + rw
            shift = (rh - 1) * W + (rw - 1)
            src = xw_ref[:, PAD + shift:PAD + shift + HW]           # (Cin, HW)
            patch = src if shift == 0 else src * m_ref[t]
            d = jnp.dot(g_ref[t].astype(compute_dtype),
                        patch.astype(compute_dtype),
                        preferred_element_type=jnp.float32)         # (4*Cout, HW) on MXU
            acc = d if acc is None else acc + d

    y = acc + b_ref[1]                   # bias1b: avg-pool of a constant is the constant
    out_ref[0] = jnp.maximum(y, NEG_SLOPE * y).astype(out_ref.dtype)   # LeakyReLU (f32)


def _make_phase_tap_weights(weight):
    """Fold kernel flip + AvgPool2d(2,1) + stride-2 phase split into (9, 4*Cout, Cin).

    G[rh*3+rw, (eh*2+ew)*Cout + oc, ic] multiplies xpad[ic, h+rh-1, w+rw-1] (zero-padded
    x + bias1a) and the sum over (rh, rw, ic) gives output pixel (oc, 2h+eh, 2w+ew).
    """
    Cin, Cout = weight.shape[0], weight.shape[1]
    wk = jnp.transpose(weight, (2, 3, 0, 1)).astype(jnp.float32)      # (kh, kw, ic, oc)
    wkp = jnp.pad(wk, ((1, 1), (1, 1), (0, 0), (0, 0)))               # (6, 6, ic, oc)
    # avg-pool folded weight: wp[u, v] = 0.25 * sum_{a,b in {0,1}} wk[u-1+a, v-1+b]
    wp = 0.25 * sum(wkp[a:a + 5, b:b + 5] for a in range(2) for b in range(2))  # (5,5,..)
    zero = jnp.zeros((Cin, Cout), jnp.float32)
    taps = []
    for rh in range(3):
        for rw in range(3):
            phases = []
            for eh in range(2):
                for ew in range(2):
                    u, v = eh - 2 * rh + 4, ew - 2 * rw + 4
                    blk = wp[u, v] if (0 <= u <= 4 and 0 <= v <= 4) else zero   # (ic, oc)
                    phases.append(blk.T)                                        # (oc, ic)
            taps.append(jnp.concatenate(phases, axis=0))                        # (4*Cout, Cin)
    return jnp.stack(taps, axis=0)                                              # (9, 4*Cout, Cin)


def _make_tap_masks(H, W):
    """{0,1} masks (9, 1, H*W): tap (rh, rw) keeps flat positions whose source pixel
    (h+rh-1, w+rw-1) lies inside the image (transposed-conv boundary is zero)."""
    hh = jnp.arange(H).reshape(H, 1)
    ww = jnp.arange(W).reshape(1, W)
    masks = []
    for rh in range(3):
        dh = rh - 1
        for rw in range(3):
            dw = rw - 1
            ok = ((hh + dh >= 0) & (hh + dh < H) & (ww + dw >= 0) & (ww + dw < W))
            masks.append(ok.reshape(1, H * W))
    return jnp.stack(masks, axis=0).astype(jnp.float32)               # (9, 1, H*W)


def transconv_up_2d(x_nchw, weight, bias1a, bias1b, *, compute_dtype=jnp.float32):
    """Forward of Transconv_up_2d (use_upsample=False, kernel=4).

    x_nchw : (N, Cin, H, W) float32
    weight : (Cin, Cout, 4, 4) float32   (PyTorch ConvTranspose2d weight layout)
    bias1a, bias1b : (1,) float32
    compute_dtype  : MXU operand dtype; jnp.bfloat16 recommended on v6e/v7x at
                     production channel counts (accumulation + epilogue stay f32).
    returns: (N, Cout, 2H, 2W) float32
    """
    N, Cin, H, W = x_nchw.shape
    Cout = weight.shape[1]
    HW = H * W
    PAD = ((W + 1 + 127) // 128) * 128     # 128-aligned border so interior store is aligned

    # NCHW -> (N, Cin, H*W) is a pure bitcast of the contiguous buffer (no transpose,
    # no extra HBM pass over x): the kernel consumes the PyTorch layout directly.
    x_flat = x_nchw.reshape(N, Cin, HW).astype(jnp.float32)
    g_taps = _make_phase_tap_weights(weight).astype(compute_dtype)    # (9, 4*Cout, Cin)
    tap_mask = _make_tap_masks(H, W)                                  # (9, 1, HW)
    bias = jnp.concatenate([bias1a, bias1b]).astype(jnp.float32)      # (2,) -> SMEM

    kernel = functools.partial(_transconv_up_kernel, H=H, W=W, PAD=PAD,
                               compute_dtype=compute_dtype)

    out_flat = pl.pallas_call(
        kernel,
        out_shape=jax.ShapeDtypeStruct((N, 4 * Cout, HW), jnp.float32),
        grid=(N,),
        in_specs=[
            pl.BlockSpec((1, Cin, HW), lambda n: (n, 0, 0)),
            # constant index_maps -> block revisit: weights / masks are DMA'd once.
            pl.BlockSpec((9, 4 * Cout, Cin), lambda n: (0, 0, 0)),
            pl.BlockSpec((9, 1, HW), lambda n: (0, 0, 0)),
            pl.BlockSpec(memory_space=pltpu.MemorySpace.SMEM),
        ],
        out_specs=pl.BlockSpec((1, 4 * Cout, HW), lambda n: (n, 0, 0)),
        scratch_shapes=[pltpu.VMEM((Cin, 2 * PAD + HW), jnp.float32)],
        compiler_params=pltpu.CompilerParams(dimension_semantics=("parallel",)),
    )(x_flat, g_taps, tap_mask, bias)

    # Interleave the 4 phases and return to NCHW (single output-sized XLA copy):
    # out_flat[n, (eh*2+ew)*Cout + oc, h*W + w] -> out[n, oc, 2h+eh, 2w+ew]
    out = out_flat.reshape(N, 2, 2, Cout, H, W)
    out = jnp.transpose(out, (0, 3, 4, 1, 5, 2))
    return out.reshape(N, Cout, 2 * H, 2 * W)


def reference_forward(x_nchw, weight, bias1a, bias1b):
    """Pure-JAX reference of the same forward (for the correctness check)."""
    K, stride, pad, opad = 4, 2, 1, 1
    w_oihw = jnp.transpose(weight, (1, 0, 2, 3))[:, :, ::-1, ::-1]
    lo, hi = K - 1 - pad, K - 1 - pad + opad
    conv = lax.conv_general_dilated(
        x_nchw + bias1a, w_oihw,
        window_strides=(1, 1),
        padding=((lo, hi), (lo, hi)),
        lhs_dilation=(stride, stride),
        dimension_numbers=("NCHW", "OIHW", "NCHW"),
        precision=lax.Precision.HIGHEST)
    pooled = lax.reduce_window(conv + bias1b, 0.0, lax.add,
                               (1, 1, 2, 2), (1, 1, 1, 1), "VALID") / 4.0
    return jnp.where(pooled >= 0, pooled, NEG_SLOPE * pooled)


if __name__ == "__main__":
    key = jax.random.PRNGKey(0)
    k1, k2 = jax.random.split(key)

    N, Cin, H, W = 2, 4, 16, 16
    Cout, K = 8, 4

    x = jax.random.normal(k1, (N, Cin, H, W), jnp.float32)
    # PyTorch initializes bias1a/bias1b to 0; use nonzero values here so both bias paths
    # are actually exercised by the check.
    weight = 0.1 * jax.random.normal(k2, (Cin, Cout, K, K), jnp.float32)
    bias1a = jnp.array([0.05], jnp.float32)
    bias1b = jnp.array([-0.02], jnp.float32)

    out = jax.block_until_ready(transconv_up_2d(x, weight, bias1a, bias1b))
    ref = jax.block_until_ready(reference_forward(x, weight, bias1a, bias1b))

    assert out.shape == (N, Cout, 2 * H, 2 * W), out.shape
    max_err = float(jnp.max(jnp.abs(out - ref)))
    assert jnp.allclose(out, ref, atol=2e-4, rtol=2e-4), f"max_err={max_err}"
    print("KERNEL_OK")
</pallas_src>

<mosaic_0001>
module attributes {stable_mosaic.version = 11 : i64} {
  func.func @_transconv_up_kernel(%arg0: i32, %arg1: memref<1x4x256xf32, #tpu.memory_space<vmem>>, %arg2: memref<9x32x4xf32, #tpu.memory_space<vmem>>, %arg3: memref<9x1x256xf32, #tpu.memory_space<vmem>>, %arg4: memref<2xf32, #tpu.memory_space<smem>>, %arg5: memref<1x32x256xf32, #tpu.memory_space<vmem>>, %arg6: memref<4x512xf32, #tpu.memory_space<vmem>>) attributes {dimension_semantics = [#tpu.dimension_semantics<parallel>], iteration_bounds = array<i64: 2>, scalar_prefetch = 0 : i64, scratch_operands = 1 : i64, tpu.core_type = #tpu.core_type<tc>, window_params = [{transform_indices = @transform_0, window_bounds = array<i64: 1, 4, 256>}, {pipeline_mode = #tpu.pipeline_mode<synchronous>, transform_indices = @transform_1, window_bounds = array<i64: 9, 32, 4>}, {pipeline_mode = #tpu.pipeline_mode<synchronous>, transform_indices = @transform_2, window_bounds = array<i64: 9, 1, 256>}, {transform_indices = @transform_3, window_bounds = array<i64: 2>}, {transform_indices = @transform_4, window_bounds = array<i64: 1, 32, 256>}]} {
    %cst = arith.constant 0.000000e+00 : f32
    %0 = vector.broadcast %cst : f32 to vector<4x128xf32>
    %c0 = arith.constant 0 : index
    %c0_0 = arith.constant 0 : index
    %1 = vector.load %arg6[%c0, %c0_0] : memref<4x512xf32, #tpu.memory_space<vmem>>, vector<4x128xf32>
    tpu.vector_store %arg6[%c0, %c0_0], %0 {strides = array<i32>} : memref<4x512xf32, #tpu.memory_space<vmem>>, vector<4x128xf32>,
    %c0_1 = arith.constant 0 : index
    %c384 = arith.constant 384 : index
    %2 = vector.load %arg6[%c0_1, %c384] : memref<4x512xf32, #tpu.memory_space<vmem>>, vector<4x128xf32>
    tpu.vector_store %arg6[%c0_1, %c384], %0 {strides = array<i32>} : memref<4x512xf32, #tpu.memory_space<vmem>>, vector<4x128xf32>,
    %c0_2 = arith.constant 0 : index
    %c0_3 = arith.constant 0 : index
    %c0_4 = arith.constant 0 : index
    %3 = vector.load %arg1[%c0_2, %c0_3, %c0_4] : memref<1x4x256xf32, #tpu.memory_space<vmem>>, vector<1x4x256xf32>
    %4 = vector.shape_cast %3 : vector<1x4x256xf32> to vector<4x256xf32>
    %c0_5 = arith.constant 0 : index
    %5 = memref.load %arg4[%c0_5] : memref<2xf32, #tpu.memory_space<smem>>
    %6 = vector.broadcast %5 : f32 to vector<4x256xf32>
    %7 = arith.addf %4, %6 : vector<4x256xf32>
    %c0_6 = arith.constant 0 : index
    %c128 = arith.constant 128 : index
    %8 = vector.load %arg6[%c0_6, %c128] : memref<4x512xf32, #tpu.memory_space<vmem>>, vector<4x256xf32>
    tpu.vector_store %arg6[%c0_6, %c128], %7 {strides = array<i32>} : memref<4x512xf32, #tpu.memory_space<vmem>>, vector<4x256xf32>,
    %c0_7 = arith.constant 0 : index
    %c111 = arith.constant 111 : index
    %9 = vector.load %arg6[%c0_7, %c111] : memref<4x512xf32, #tpu.memory_space<vmem>>, vector<4x256xf32>
    %c0_8 = arith.constant 0 : index
    %c0_9 = arith.constant 0 : index
    %c0_10 = arith.constant 0 : index
    %10 = vector.load %arg3[%c0_8, %c0_9, %c0_10] : memref<9x1x256xf32, #tpu.memory_space<vmem>>, vector<1x1x256xf32>
    %11 = vector.shape_cast %10 : vector<1x1x256xf32> to vector<1x256xf32>
    %12 = vector.broadcast %11 : vector<1x256xf32> to vector<4x256xf32>
    %13 = arith.mulf %9, %12 : vector<4x256xf32>
    %c0_11 = arith.constant 0 : index
    %c0_12 = arith.constant 0 : index
    %c0_13 = arith.constant 0 : index
    %14 = vector.load %arg2[%c0_11, %c0_12, %c0_13] : memref<9x32x4xf32, #tpu.memory_space<vmem>>, vector<1x32x4xf32>
    %15 = vector.shape_cast %14 : vector<1x32x4xf32> to vector<32x4xf32>
    %cst_14 = arith.constant dense<0.000000e+00> : vector<32x256xf32>
    %16 = tpu.matmul %15, %13, %cst_14 {dimension_numbers = #tpu.dot_dimension_numbers<[1], [0], [0], [1], [0, 0, 1, 1], [], []>} : vector<32x4xf32>, vector<4x256xf32>, vector<32x256xf32> -> vector<32x256xf32>
    %c0_15 = arith.constant 0 : index
    %c112 = arith.constant 112 : index
    %17 = vector.load %arg6[%c0_15, %c112] : memref<4x512xf32, #tpu.memory_space<vmem>>, vector<4x256xf32>
    %c1 = arith.constant 1 : index
    %c0_16 = arith.constant 0 : index
    %c0_17 = arith.constant 0 : index
    %18 = vector.load %arg3[%c1, %c0_16, %c0_17] : memref<9x1x256xf32, #tpu.memory_space<vmem>>, vector<1x1x256xf32>
    %19 = vector.shape_cast %18 : vector<1x1x256xf32> to vector<1x256xf32>
    %20 = vector.broadcast %19 : vector<1x256xf32> to vector<4x256xf32>
    %21 = arith.mulf %17, %20 : vector<4x256xf32>
    %c1_18 = arith.constant 1 : index
    %c0_19 = arith.constant 0 : index
    %c0_20 = arith.constant 0 : index
    %22 = vector.load %arg2[%c1_18, %c0_19, %c0_20] : memref<9x32x4xf32, #tpu.memory_space<vmem>>, vector<1x32x4xf32>
    %23 = vector.shape_cast %22 : vector<1x32x4xf32> to vector<32x4xf32>
    %cst_21 = arith.constant dense<0.000000e+00> : vector<32x256xf32>
    %24 = tpu.matmul %23, %21, %cst_21 {dimension_numbers = #tpu.dot_dimension_numbers<[1], [0], [0], [1], [0, 0, 1, 1], [], []>} : vector<32x4xf32>, vector<4x256xf32>, vector<32x256xf32> -> vector<32x256xf32>
    %25 = arith.addf %16, %24 : vector<32x256xf32>
    %c0_22 = arith.constant 0 : index
    %c113 = arith.constant 113 : index
    %26 = vector.load %arg6[%c0_22, %c113] : memref<4x512xf32, #tpu.memory_space<vmem>>, vector<4x256xf32>
    %c2 = arith.constant 2 : index
    %c0_23 = arith.constant 0 : index
    %c0_24 = arith.constant 0 : index
    %27 = vector.load %arg3[%c2, %c0_23, %c0_24] : memref<9x1x256xf32, #tpu.memory_space<vmem>>, vector<1x1x256xf32>
    %28 = vector.shape_cast %27 : vector<1x1x256xf32> to vector<1x256xf32>
    %29 = vector.broadcast %28 : vector<1x256xf32> to vector<4x256xf32>
    %30 = arith.mulf %26, %29 : vector<4x256xf32>
    %c2_25 = arith.constant 2 : index
    %c0_26 = arith.constant 0 : index
    %c0_27 = arith.constant 0 : index
    %31 = vector.load %arg2[%c2_25, %c0_26, %c0_27] : memref<9x32x4xf32, #tpu.memory_space<vmem>>, vector<1x32x4xf32>
    %32 = vector.shape_cast %31 : vector<1x32x4xf32> to vector<32x4xf32>
    %cst_28 = arith.constant dense<0.000000e+00> : vector<32x256xf32>
    %33 = tpu.matmul %32, %30, %cst_28 {dimension_numbers = #tpu.dot_dimension_numbers<[1], [0], [0], [1], [0, 0, 1, 1], [], []>} : vector<32x4xf32>, vector<4x256xf32>, vector<32x256xf32> -> vector<32x256xf32>
    %34 = arith.addf %25, %33 : vector<32x256xf32>
    %c0_29 = arith.constant 0 : index
    %c127 = arith.constant 127 : index
    %35 = vector.load %arg6[%c0_29, %c127] : memref<4x512xf32, #tpu.memory_space<vmem>>, vector<4x256xf32>
    %c3 = arith.constant 3 : index
    %c0_30 = arith.constant 0 : index
    %c0_31 = arith.constant 0 : index
    %36 = vector.load %arg3[%c3, %c0_30, %c0_31] : memref<9x1x256xf32, #tpu.memory_space<vmem>>, vector<1x1x256xf32>
    %37 = vector.shape_cast %36 : vector<1x1x256xf32> to vector<1x256xf32>
    %38 = vector.broadcast %37 : vector<1x256xf32> to vector<4x256xf32>
    %39 = arith.mulf %35, %38 : vector<4x256xf32>
    %c3_32 = arith.constant 3 : index
    %c0_33 = arith.constant 0 : index
    %c0_34 = arith.constant 0 : index
    %40 = vector.load %arg2[%c3_32, %c0_33, %c0_34] : memref<9x32x4xf32, #tpu.memory_space<vmem>>, vector<1x32x4xf32>
    %41 = vector.shape_cast %40 : vector<1x32x4xf32> to vector<32x4xf32>
    %cst_35 = arith.constant dense<0.000000e+00> : vector<32x256xf32>
    %42 = tpu.matmul %41, %39, %cst_35 {dimension_numbers = #tpu.dot_dimension_numbers<[1], [0], [0], [1], [0, 0, 1, 1], [], []>} : vector<32x4xf32>, vector<4x256xf32>, vector<32x256xf32> -> vector<32x256xf32>
    %43 = arith.addf %34, %42 : vector<32x256xf32>
    %c0_36 = arith.constant 0 : index
    %c128_37 = arith.constant 128 : index
    %44 = vector.load %arg6[%c0_36, %c128_37] : memref<4x512xf32, #tpu.memory_space<vmem>>, vector<4x256xf32>
    %c4 = arith.constant 4 : index
    %c0_38 = arith.constant 0 : index
    %c0_39 = arith.constant 0 : index
    %45 = vector.load %arg2[%c4, %c0_38, %c0_39] : memref<9x32x4xf32, #tpu.memory_space<vmem>>, vector<1x32x4xf32>
    %46 = vector.shape_cast %45 : vector<1x32x4xf32> to vector<32x4xf32>
    %cst_40 = arith.constant dense<0.000000e+00> : vector<32x256xf32>
    %47 = tpu.matmul %46, %44, %cst_40 {dimension_numbers = #tpu.dot_dimension_numbers<[1], [0], [0], [1], [0, 0, 1, 1], [], []>} : vector<32x4xf32>, vector<4x256xf32>, vector<32x256xf32> -> vector<32x256xf32>
    %48 = arith.addf %43, %47 : vector<32x256xf32>
    %c0_41 = arith.constant 0 : index
    %c129 = arith.constant 129 : index
    %49 = vector.load %arg6[%c0_41, %c129] : memref<4x512xf32, #tpu.memory_space<vmem>>, vector<4x256xf32>
    %c5 = arith.constant 5 : index
    %c0_42 = arith.constant 0 : index
    %c0_43 = arith.constant 0 : index
    %50 = vector.load %arg3[%c5, %c0_42, %c0_43] : memref<9x1x256xf32, #tpu.memory_space<vmem>>, vector<1x1x256xf32>
    %51 = vector.shape_cast %50 : vector<1x1x256xf32> to vector<1x256xf32>
    %52 = vector.broadcast %51 : vector<1x256xf32> to vector<4x256xf32>
    %53 = arith.mulf %49, %52 : vector<4x256xf32>
    %c5_44 = arith.constant 5 : index
    %c0_45 = arith.constant 0 : index
    %c0_46 = arith.constant 0 : index
    %54 = vector.load %arg2[%c5_44, %c0_45, %c0_46] : memref<9x32x4xf32, #tpu.memory_space<vmem>>, vector<1x32x4xf32>
    %55 = vector.shape_cast %54 : vector<1x32x4xf32> to vector<32x4xf32>
    %cst_47 = arith.constant dense<0.000000e+00> : vector<32x256xf32>
    %56 = tpu.matmul %55, %53, %cst_47 {dimension_numbers = #tpu.dot_dimension_numbers<[1], [0], [0], [1], [0, 0, 1, 1], [], []>} : vector<32x4xf32>, vector<4x256xf32>, vector<32x256xf32> -> vector<32x256xf32>
    %57 = arith.addf %48, %56 : vector<32x256xf32>
    %c0_48 = arith.constant 0 : index
    %c143 = arith.constant 143 : index
    %58 = vector.load %arg6[%c0_48, %c143] : memref<4x512xf32, #tpu.memory_space<vmem>>, vector<4x256xf32>
    %c6 = arith.constant 6 : index
    %c0_49 = arith.constant 0 : index
    %c0_50 = arith.constant 0 : index
    %59 = vector.load %arg3[%c6, %c0_49, %c0_50] : memref<9x1x256xf32, #tpu.memory_space<vmem>>, vector<1x1x256xf32>
    %60 = vector.shape_cast %59 : vector<1x1x256xf32> to vector<1x256xf32>
    %61 = vector.broadcast %60 : vector<1x256xf32> to vector<4x256xf32>
    %62 = arith.mulf %58, %61 : vector<4x256xf32>
    %c6_51 = arith.constant 6 : index
    %c0_52 = arith.constant 0 : index
    %c0_53 = arith.constant 0 : index
    %63 = vector.load %arg2[%c6_51, %c0_52, %c0_53] : memref<9x32x4xf32, #tpu.memory_space<vmem>>, vector<1x32x4xf32>
    %64 = vector.shape_cast %63 : vector<1x32x4xf32> to vector<32x4xf32>
    %cst_54 = arith.constant dense<0.000000e+00> : vector<32x256xf32>
    %65 = tpu.matmul %64, %62, %cst_54 {dimension_numbers = #tpu.dot_dimension_numbers<[1], [0], [0], [1], [0, 0, 1, 1], [], []>} : vector<32x4xf32>, vector<4x256xf32>, vector<32x256xf32> -> vector<32x256xf32>
    %66 = arith.addf %57, %65 : vector<32x256xf32>
    %c0_55 = arith.constant 0 : index
    %c144 = arith.constant 144 : index
    %67 = vector.load %arg6[%c0_55, %c144] : memref<4x512xf32, #tpu.memory_space<vmem>>, vector<4x256xf32>
    %c7 = arith.constant 7 : index
    %c0_56 = arith.constant 0 : index
    %c0_57 = arith.constant 0 : index
    %68 = vector.load %arg3[%c7, %c0_56, %c0_57] : memref<9x1x256xf32, #tpu.memory_space<vmem>>, vector<1x1x256xf32>
    %69 = vector.shape_cast %68 : vector<1x1x256xf32> to vector<1x256xf32>
    %70 = vector.broadcast %69 : vector<1x256xf32> to vector<4x256xf32>
    %71 = arith.mulf %67, %70 : vector<4x256xf32>
    %c7_58 = arith.constant 7 : index
    %c0_59 = arith.constant 0 : index
    %c0_60 = arith.constant 0 : index
    %72 = vector.load %arg2[%c7_58, %c0_59, %c0_60] : memref<9x32x4xf32, #tpu.memory_space<vmem>>, vector<1x32x4xf32>
    %73 = vector.shape_cast %72 : vector<1x32x4xf32> to vector<32x4xf32>
    %cst_61 = arith.constant dense<0.000000e+00> : vector<32x256xf32>
    %74 = tpu.matmul %73, %71, %cst_61 {dimension_numbers = #tpu.dot_dimension_numbers<[1], [0], [0], [1], [0, 0, 1, 1], [], []>} : vector<32x4xf32>, vector<4x256xf32>, vector<32x256xf32> -> vector<32x256xf32>
    %75 = arith.addf %66, %74 : vector<32x256xf32>
    %c0_62 = arith.constant 0 : index
    %c145 = arith.constant 145 : index
    %76 = vector.load %arg6[%c0_62, %c145] : memref<4x512xf32, #tpu.memory_space<vmem>>, vector<4x256xf32>
    %c8 = arith.constant 8 : index
    %c0_63 = arith.constant 0 : index
    %c0_64 = arith.constant 0 : index
    %77 = vector.load %arg3[%c8, %c0_63, %c0_64] : memref<9x1x256xf32, #tpu.memory_space<vmem>>, vector<1x1x256xf32>
    %78 = vector.shape_cast %77 : vector<1x1x256xf32> to vector<1x256xf32>
    %79 = vector.broadcast %78 : vector<1x256xf32> to vector<4x256xf32>
    %80 = arith.mulf %76, %79 : vector<4x256xf32>
    %c8_65 = arith.constant 8 : index
    %c0_66 = arith.constant 0 : index
    %c0_67 = arith.constant 0 : index
    %81 = vector.load %arg2[%c8_65, %c0_66, %c0_67] : memref<9x32x4xf32, #tpu.memory_space<vmem>>, vector<1x32x4xf32>
    %82 = vector.shape_cast %81 : vector<1x32x4xf32> to vector<32x4xf32>
    %cst_68 = arith.constant dense<0.000000e+00> : vector<32x256xf32>
    %83 = tpu.matmul %82, %80, %cst_68 {dimension_numbers = #tpu.dot_dimension_numbers<[1], [0], [0], [1], [0, 0, 1, 1], [], []>} : vector<32x4xf32>, vector<4x256xf32>, vector<32x256xf32> -> vector<32x256xf32>
    %84 = arith.addf %75, %83 : vector<32x256xf32>
    %c1_69 = arith.constant 1 : index
    %85 = memref.load %arg4[%c1_69] : memref<2xf32, #tpu.memory_space<smem>>
    %86 = vector.broadcast %85 : f32 to vector<32x256xf32>
    %87 = arith.addf %84, %86 : vector<32x256xf32>
    %cst_70 = arith.constant 0.00999999977 : f32
    %88 = vector.broadcast %cst_70 : f32 to vector<32x256xf32>
    %89 = arith.mulf %88, %87 : vector<32x256xf32>
    %90 = arith.maximumf %87, %89 : vector<32x256xf32>
    %c0_71 = arith.constant 0 : index
    %c0_72 = arith.constant 0 : index
    %c0_73 = arith.constant 0 : index
    %91 = vector.load %arg5[%c0_71, %c0_72, %c0_73] : memref<1x32x256xf32, #tpu.memory_space<vmem>>, vector<1x32x256xf32>
    %92 = vector.shape_cast %91 : vector<1x32x256xf32> to vector<32x256xf32>
    %93 = vector.shape_cast %90 : vector<32x256xf32> to vector<1x32x256xf32>
    tpu.vector_store %arg5[%c0_71, %c0_72, %c0_73], %93 {strides = array<i32>} : memref<1x32x256xf32, #tpu.memory_space<vmem>>, vector<1x32x256xf32>,
    return
  }
  func.func @transform_0(%arg0: i32) -> (i32, i32, i32) {
    %c0_i32 = arith.constant 0 : i32
    %c0_i32_0 = arith.constant 0 : i32
    %c0_i32_1 = arith.constant 0 : i32
    return %arg0, %c0_i32, %c0_i32_0 : i32, i32, i32
  }
  func.func @transform_1(%arg0: i32) -> (i32, i32, i32) {
    %c0_i32 = arith.constant 0 : i32
    %c0_i32_0 = arith.constant 0 : i32
    %c0_i32_1 = arith.constant 0 : i32
    %c0_i32_2 = arith.constant 0 : i32
    return %c0_i32, %c0_i32_0, %c0_i32_1 : i32, i32, i32
  }
  func.func @transform_2(%arg0: i32) -> (i32, i32, i32) {
    %c0_i32 = arith.constant 0 : i32
    %c0_i32_0 = arith.constant 0 : i32
    %c0_i32_1 = arith.constant 0 : i32
    %c0_i32_2 = arith.constant 0 : i32
    return %c0_i32, %c0_i32_0, %c0_i32_1 : i32, i32, i32
  }
  func.func @transform_3(%arg0: i32) -> i32 {
    %c0_i32 = arith.constant 0 : i32
    %c0_i32_0 = arith.constant 0 : i32
    return %c0_i32 : i32
  }
  func.func @transform_4(%arg0: i32) -> (i32, i32, i32) {
    %c0_i32 = arith.constant 0 : i32
    %c0_i32_0 = arith.constant 0 : i32
    %c0_i32_1 = arith.constant 0 : i32
    return %arg0, %c0_i32, %c0_i32_0 : i32, i32, i32
  }
}

</mosaic_0001>

<llo_original>
// kernel: tpu_custom_call.1
$region0: #{tpu_custom_call.1}
  #allocation0 [shape = 'u32[]', space=smem, size = 0x4, offset = 0x4, fixed_abs, tag = 'smem constant byte address 0x4 - core index']
  #allocation1 [shape = 'u32[144,128]{1,0:T(1,128)}', space=vmem, size = 0x12000, scoped, tag = 'internal scratch']
  #allocation2 [shape = 'f32[4,512]{1,0:T(4,128)}', space=vmem, size = 0x2000, scoped, tag = 'scratch operand']
  %s0 = inlined_call_operand.vmem [shape: f32[2,4,256], index: 0, kind: input, shape index: {}]
  %s1 = inlined_call_operand.vmem [shape: f32[9,32,4], index: 1, kind: input, shape index: {}]
  %s2 = inlined_call_operand.vmem [shape: f32[9,1,256], index: 2, kind: input, shape index: {}]
  %s3 = inlined_call_operand.vmem [shape: f32[2], index: 3, kind: input, shape index: {}]
  %s4 = inlined_call_operand.hbm [shape: f32[2,32,256], index: 4, kind: output, shape index: {}]
  %s5 = sld [smem:[#allocation0]]
  $region53: #{tpu_custom_call.1} parent=0
    _
  %s7 = ssub.s32 1, %s5
  %s8 = scalar_select 0, %s7, %s5
  $region1: #{tpu_custom_call.1} parent=0
    #allocation3 [shape = 'u8[512]{0}', space=smem, size = 0x200, scoped, tag = 'input window, operand 3, single buffered']
    #allocation4 [shape = 's32[2]{0}', space=sflag, size = 0x8, scoped, tag = 'scoped memory for tpu_custom_call.1']
    #allocation5 [shape = 's32[2]{0}', space=sflag, size = 0x8, scoped, tag = 'scoped memory for tpu_custom_call.1']
    #allocation6 [shape = 'u8[65536]{0}', space=vmem, size = 0x10000, scoped, tag = 'output window, operand 0']
    %9 = vsyncpa [#allocation5], 0
    %10 = vsyncpa [#allocation4], 0
    %s11 = scalar_lea.sflag [#allocation4], 1
    %12 = vsyncpa %s11, 0
    loop: start=0, step=1, limit=4
    $region2: #{tpu_custom_call.1} parent=1 // loop_pre_header
      _
    $region3: #{tpu_custom_call.1} parent=1 // loop_header
      %s14 = sphi 0, %s18
      %p15 = scmp.ge.s32.totalorder %s14, 4
      %s24 = sphi 0, %s26
      %s27 = sphi 0, %s24
      %s28 = sphi 0, %s27
      %s44 = sphi 0, %s28
      %s48 = sphi 0, %s48
      %s50 = sphi 0, %s48
      %s51 = sphi 0, %s50
      %s65 = sphi 0, %s51
      %s69 = sphi 0, %s69
      %s71 = sphi 0, %s69
      %s72 = sphi 0, %s71
      %s86 = sphi 0, %s72
      %s90 = sphi 0, %s90
      %s92 = sphi 0, %s90
      %s93 = sphi 0, %s92
      %s107 = sphi 0, %s93
      %s113 = sphi 0, %s115
      %s116 = sphi 0, %s113
      %s117 = sphi 0, %s116
      %s133 = sphi 0, %s117
    $region4: #{tpu_custom_call.1} parent=1 // loop_header_branch
      %17 = sbr.rel (%p15) target = $region8
    $region5: #{tpu_custom_call.1} parent=1 // loop_body
      %s19 = ssub.s32 %s14, 1
      %s20 = ssub.s32 %s14, 2
      %s21 = sadd.s32 %s14, 1
      %s22 = ssub.s32 %s14, %s21
      %p23 = scmp.eq.s32.totalorder %s22, 0
      %s25 = sadd.s32 %s24, 1
      %s26 = scalar_select %p23, %s24, %s25
      %p29 = pneg %p23
      %p30 = scmp.eq.s32.totalorder %s14, 1
      %p31 = por %p29, %p30
      %p32 = scmp.ne.s32.totalorder %s24, %s27
      %p33 = scmp.eq.s32.totalorder %s14, 0
      %p34 = por %p32, %p33
      %p35 = scmp.ne.s32.totalorder %s24, %s27
      %p36 = scmp.eq.s32.totalorder %s19, 1
      %p37 = por %p35, %p36
      %p38 = scmp.ne.s32.totalorder %s27, %s28
      %p39 = scmp.eq.s32.totalorder %s19, 0
      %p40 = por %p38, %p39
      %p41 = scmp.ne.s32.totalorder %s27, %s28
      %p42 = scmp.eq.s32.totalorder %s20, 1
      %p43 = por %p41, %p42
      %p45 = scmp.ne.s32.totalorder %s28, %s44
      %p46 = scmp.eq.s32.totalorder %s20, 0
      %p47 = por %p45, %p46
      %s49 = sadd.s32 %s48, 1
      %p52 = scmp.eq.s32.totalorder %s14, 1
      %p53 = scmp.ne.s32.totalorder %s48, %s50
      %p54 = scmp.eq.s32.totalorder %s14, 0
      %p55 = por %p53, %p54
      %p56 = scmp.ne.s32.totalorder %s48, %s50
      %p57 = scmp.eq.s32.totalorder %s19, 1
      %p58 = por %p56, %p57
      %p59 = scmp.ne.s32.totalorder %s50, %s51
      %p60 = scmp.eq.s32.totalorder %s19, 0
      %p61 = por %p59, %p60
      %p62 = scmp.ne.s32.totalorder %s50, %s51
      %p63 = scmp.eq.s32.totalorder %s20, 1
      %p64 = por %p62, %p63
      %p66 = scmp.ne.s32.totalorder %s51, %s65
      %p67 = scmp.eq.s32.totalorder %s20, 0
      %p68 = por %p66, %p67
      %s70 = sadd.s32 %s69, 1
      %p73 = scmp.eq.s32.totalorder %s14, 1
      %p74 = scmp.ne.s32.totalorder %s69, %s71
      %p75 = scmp.eq.s32.totalorder %s14, 0
      %p76 = por %p74, %p75
      %p77 = scmp.ne.s32.totalorder %s69, %s71
      %p78 = scmp.eq.s32.totalorder %s19, 1
      %p79 = por %p77, %p78
      %p80 = scmp.ne.s32.totalorder %s71, %s72
      %p81 = scmp.eq.s32.totalorder %s19, 0
      %p82 = por %p80, %p81
      %p83 = scmp.ne.s32.totalorder %s71, %s72
      %p84 = scmp.eq.s32.totalorder %s20, 1
      %p85 = por %p83, %p84
      %p87 = scmp.ne.s32.totalorder %s72, %s86
      %p88 = scmp.eq.s32.totalorder %s20, 0
      %p89 = por %p87, %p88
      %s91 = sadd.s32 %s90, 1
      %p94 = scmp.eq.s32.totalorder %s14, 1
      %p95 = scmp.ne.s32.totalorder %s90, %s92
      %p96 = scmp.eq.s32.totalorder %s14, 0
      %p97 = por %p95, %p96
      %p98 = scmp.ne.s32.totalorder %s90, %s92
      %p99 = scmp.eq.s32.totalorder %s19, 1
      %p100 = por %p98, %p99
      %p101 = scmp.ne.s32.totalorder %s92, %s93
      %p102 = scmp.eq.s32.totalorder %s19, 0
      %p103 = por %p101, %p102
      %p104 = scmp.ne.s32.totalorder %s92, %s93
      %p105 = scmp.eq.s32.totalorder %s20, 1
      %p106 = por %p104, %p105
      %p108 = scmp.ne.s32.totalorder %s93, %s107
      %p109 = scmp.eq.s32.totalorder %s20, 0
      %p110 = por %p108, %p109
      %s111 = ssub.s32 %s14, %s21
      %p112 = scmp.eq.s32.totalorder %s111, 0
      %s114 = sadd.s32 %s113, 1
      %s115 = scalar_select %p112, %s113, %s114
      %p118 = pneg %p112
      %p119 = scmp.eq.s32.totalorder %s14, 1
      %p120 = por %p118, %p119
      %p121 = scmp.ne.s32.totalorder %s113, %s116
      %p122 = scmp.eq.s32.totalorder %s14, 0
      %p123 = por %p121, %p122
      %p124 = scmp.ne.s32.totalorder %s113, %s116
      %p125 = scmp.eq.s32.totalorder %s19, 1
      %p126 = por %p124, %p125
      %p127 = scmp.ne.s32.totalorder %s116, %s117
      %p128 = scmp.eq.s32.totalorder %s19, 0
      %p129 = por %p127, %p128
      %p130 = scmp.ne.s32.totalorder %s116, %s117
      %p131 = scmp.eq.s32.totalorder %s20, 1
      %p132 = por %p130, %p131
      %p134 = scmp.ne.s32.totalorder %s117, %s133
      %p135 = scmp.eq.s32.totalorder %s20, 0
      %p136 = por %p134, %p135
      %p137 = scmp.le.s32.totalorder 1, %s14
      %p138 = scmp.lt.s32.totalorder %s14, 3
      %p139 = pnand %p137, %p138
      %p140 = pneg %p139
      // Predicated region
      $region9: #{tpu_custom_call.1} parent=5 // pred_check
        _
      $region10: #{tpu_custom_call.1} parent=5 // pred_check_branch
        %142 = sbr.rel (%p139) target = $region12
      $region11: #{tpu_custom_call.1} parent=5 // pred_region
        %s143 = ssub.s32 %s14, 1
        // Predicated region
        $region13: #{tpu_custom_call.1} parent=11 // pred_check
          %p144 = pneg %p61
        $region14: #{tpu_custom_call.1} parent=11 // pred_check_branch
          %146 = sbr.rel (%p144) target = $region16
        $region15: #{tpu_custom_call.1} parent=11 // pred_region
          _
        $region16: #{tpu_custom_call.1} parent=11 // pred_fallthru
          _
        // Predicated region
        $region17: #{tpu_custom_call.1} parent=11 // pred_check
          %p147 = pneg %p82
        $region18: #{tpu_custom_call.1} parent=11 // pred_check_branch
          %149 = sbr.rel (%p147) target = $region20
        $region19: #{tpu_custom_call.1} parent=11 // pred_region
          _
        $region20: #{tpu_custom_call.1} parent=11 // pred_fallthru
          _
        // Predicated region
        $region21: #{tpu_custom_call.1} parent=11 // pred_check
          %p150 = pneg %p103
        $region22: #{tpu_custom_call.1} parent=11 // pred_check_branch
          %152 = sbr.rel (%p150) target = $region24
        $region23: #{tpu_custom_call.1} parent=11 // pred_region
          %s154 = ssub.s32 16, 16
          %155 = vsyncadd [#allocation5], %s154
          %s157 = sshll.u32 %s3, 4
          %s158 = int_to_ptr.vmem [resolvable:$true] %s157
          %160 = dma.vmem_to_smem %s158, 16, [#allocation3], [#allocation5]
        $region24: #{tpu_custom_call.1} parent=11 // pred_fallthru
          _
      $region12: #{tpu_custom_call.1} parent=5 // pred_fallthru
        _
      %p161 = scmp.lt.s32.totalorder %s14, 2
      // Predicated region
      $region25: #{tpu_custom_call.1} parent=5 // pred_check
        %p162 = pneg %p161
      $region26: #{tpu_custom_call.1} parent=5 // pred_check_branch
        %164 = sbr.rel (%p162) target = $region28
      $region27: #{tpu_custom_call.1} parent=5 // pred_region
        // Predicated region
        $region29: #{tpu_custom_call.1} parent=27 // pred_check
          %p165 = pneg %p34
        $region30: #{tpu_custom_call.1} parent=27 // pred_check_branch
          %167 = sbr.rel (%p165) target = $region32
        $region31: #{tpu_custom_call.1} parent=27 // pred_region
          %p168 = scmp.lt.s32.totalorder %s14, 1
          %s169 = scalar_select %p168, %s14, 1
          %s170 = smul.addr %s169, 2
          %s171 = smul.addr %s170, 4
          %s172 = scalar_lea.vmem %s0, %s171
        $region32: #{tpu_custom_call.1} parent=27 // pred_fallthru
          _
      $region28: #{tpu_custom_call.1} parent=5 // pred_fallthru
        _
      %p173 = scmp.le.s32.totalorder 1, %s14
      %p174 = scmp.lt.s32.totalorder %s14, 3
      %p175 = pnand %p173, %p174
      %p176 = pneg %p175
      // Predicated region
      $region33: #{tpu_custom_call.1} parent=5 // pred_check
        _
      $region34: #{tpu_custom_call.1} parent=5 // pred_check_branch
        %178 = sbr.rel (%p175) target = $region36
      $region35: #{tpu_custom_call.1} parent=5 // pred_region
        %s179 = ssub.s32 %s14, 1
        // Predicated region
        $region37: #{tpu_custom_call.1} parent=35 // pred_check
          %p180 = pneg %p103
        $region38: #{tpu_custom_call.1} parent=35 // pred_check_branch
          %182 = sbr.rel (%p180) target = $region40
        $region39: #{tpu_custom_call.1} parent=35 // pred_region
          %183 = dma.done [#allocation5], 16
        $region40: #{tpu_custom_call.1} parent=35 // pred_fallthru
          _
        %184 = sfence
        %p185 = scmp.lt.s32.totalorder %s19, 1
        %s186 = scalar_select %p185, %s19, 1
        %s187 = smul.addr %s186, 2
        %s188 = smul.addr %s187, 4
        %s189 = scalar_lea.vmem %s0, %s188
        %p190 = pneg %p40
        %p191 = pneg %p37
        %p192 = pneg %p61
        %p193 = pneg %p58
        %p194 = pneg %p82
        %p195 = pneg %p79
        %p196 = pneg %p103
        %p197 = pneg %p100
        %p198 = pneg %p129
        %p199 = pneg %p126
        %s200 = sand.u32 %s116, 1
        %s201 = scalar_lea.sflag [#allocation4], %s200
        %s202 = sand.u32 %s116, 1
        %s203 = smul.addr %s202, 64
        %s204 = scalar_lea.vmem [#allocation6], %s203
        %p205 = scmp.lt.s32.totalorder %s19, 1
        %s206 = scalar_select %p205, %s19, 1
        %s207 = smul.addr %s206, 2
        %s208 = smul.addr %s207, 4
        %s209 = scalar_lea.vmem %s0, %s208
        %210 = vst [vmem:[#allocation2] sm:$0xf] 0.0
        %211 = vst [vmem:[#allocation2 + $0xc] sm:$0xf] 0.0
        %v212 = vld [vmem:[%s209] sm:$0xff]
        %s213 = sld [smem:[#allocation3]]
        %v214 = vstv %s213
        %v215 = vadd.f32 %v212, %v214
        %216 = vst [vmem:[#allocation2 + $0x4] sm:$0xff] %v215
        %v217 = vld [vmem:[#allocation2] sm:$0xff]
        %v218 = vld [vmem:[#allocation2 + $0x8] sm:$0xf]
        %v219 = vld [vmem:[%s2] sm:$0x3]
        %v221 = vlaneseq
        %v222 = vshrl.u32 %v221, 7
        %v223 = vsub.s32 0, %v222
        %v224 = vrot.slane %v219, %v223
        %v225 = vlaneseq
        %v226 = vshrl.u32 %v225, 7
        %v227 = vsub.s32 1, %v226
        %v228 = vrot.slane %v219, %v227
        %v229 = vcombine.low %v224, %v228
        %230 = vrot.lane.b32.xlu0 %v229, 111
        %v231 = vpop.permute.xlu0 %230
        %v232 = vrot.slane %v231, 4
        %vm233 = vcmask 908288
        %v234 = vsel %vm233, %v232, %v231
        %v237 = vmul.f32 %v217, %v234
        %v238 = vmul.f32 %v218, %v232
        %v239 = vld [vmem:[%s1] sm:$0xff]
        %v240 = vld [vmem:[%s1 + $0x8] sm:$0xff]
        %v241 = vld [vmem:[%s1 + $0x10] sm:$0xff]
        %v242 = vld [vmem:[%s1 + $0x18] sm:$0xff]
        %s243 = scalar_lea.vmem %s2, 2
        %v244 = vld [vmem:[%s243] sm:$0x3]
        %v246 = vlaneseq
        %v247 = vshrl.u32 %v246, 7
        %v248 = vsub.s32 0, %v247
        %v249 = vrot.slane %v244, %v248
        %v250 = vlaneseq
        %v251 = vshrl.u32 %v250, 7
        %v252 = vsub.s32 1, %v251
        %v253 = vrot.slane %v244, %v252
        %v254 = vcombine.low %v249, %v253
        %255 = vrot.lane.b32.xlu0 %v254, 112
        %v256 = vpop.permute.xlu0 %255
        %v257 = vrot.slane %v256, 4
        %vm258 = vcmask 916480
        %v259 = vsel %vm258, %v257, %v256
        %v262 = vmul.f32 %v217, %v259
        %v263 = vmul.f32 %v218, %v257
        %s264 = scalar_lea.vmem %s1, 32
        %v265 = vld [vmem:[%s264] sm:$0xff]
        %v266 = vld [vmem:[%s264 + $0x8] sm:$0xff]
        %v267 = vld [vmem:[%s264 + $0x10] sm:$0xff]
        %v268 = vld [vmem:[%s264 + $0x18] sm:$0xff]
        %v271 = vcombine.high %v262, %v262
        %272 = vrot.lane.b32.xlu0 %v262, 16
        %v273 = vpop.permute.xlu0 %272
        %274 = vrot.lane.b32.xlu0 %v271, 16
        %v275 = vpop.permute.xlu0 %274
        %276 = vrot.lane.b32.xlu0 %v263, 16
        %v277 = vpop.permute.xlu0 %276
        %vm278 = vcmask 130048
        %v279 = vsel %vm278, %v273, %v275
        %v280 = vsel %vm278, %v275, %v277
        %vm281 = vcmask 31744
        %v283 = vsel %vm281, %v265, 0
        %v286 = vsel %vm281, %v266, 0
        %v289 = vsel %vm281, %v267, 0
        %v292 = vsel %vm281, %v268, 0
        %vm294 = vcmask 1043456
        %v295 = vsel %vm294, %v279, 0
        %v297 = vsel %vm294, %v280, 0
        %299 = vmatprep.subr.mxu0 %v297
        %300 = vmatpush1.msra.mxu0 %v295
        %301 = vmatprep.subr.mxu0 0.0
        %302 = vmatpush1.msra.mxu0 0.0
        %303 = vmatprep.subr.mxu0 0.0
        %304 = vmatpush1.msra.mxu0 0.0
        %305 = vmatprep.subr.mxu0 0.0
        %306 = vmatpush1.msra.mxu0 0.0
        %307 = vmatprep.subr.mxu0 0.0
        %308 = vmatpush1.msra.mxu0 0.0
        %309 = vmatprep.subr.mxu0 0.0
        %310 = vmatpush1.msra.mxu0 0.0
        %311 = vmatprep.subr.mxu0 0.0
        %312 = vmatpush1.msra.mxu0 0.0
        %313 = vmatprep.subr.mxu0 0.0
        %314 = vmatpush1.msra.mxu0 0.0
        %315 = vmatprep.subr.mxu0 0.0
        %316 = vmatpush1.msra.mxu0 0.0
        %317 = vmatprep.subr.mxu0 0.0
        %318 = vmatpush1.msra.mxu0 0.0
        %319 = vmatprep.subr.mxu0 0.0
        %320 = vmatpush1.msra.mxu0 0.0
        %321 = vmatprep.subr.mxu0 0.0
        %322 = vmatpush1.msra.mxu0 0.0
        %323 = vmatprep.subr.mxu0 0.0
        %324 = vmatpush1.msra.mxu0 0.0
        %325 = vmatprep.subr.mxu0 0.0
        %326 = vmatpush1.msra.mxu0 0.0
        %327 = vmatprep.subr.mxu0 0.0
        %328 = vmatpush1.msra.mxu0 0.0
        %329 = vmatprep.subr.mxu0 0.0
        %330 = vmatpush1.msra.mxu0 0.0
        %331 = vmatprep.subr.mxu0 0.0
        %332 = vmatpush1.msra.mxu0 0.0
        %333 = vmatprep.subr.mxu0 0.0
        %334 = vmatpush1.msra.mxu0 0.0
        %335 = vmatprep.subr.mxu0 0.0
        %336 = vmatpush1.msra.mxu0 0.0
        %337 = vmatprep.subr.mxu0 0.0
        %338 = vmatpush1.msra.mxu0 0.0
        %339 = vmatprep.subr.mxu0 0.0
        %340 = vmatpush1.msra.mxu0 0.0
        %341 = vmatprep.subr.mxu0 0.0
        %342 = vmatpush1.msra.mxu0 0.0
        %343 = vmatprep.subr.mxu0 0.0
        %344 = vmatpush1.msra.mxu0 0.0
        %345 = vmatprep.subr.mxu0 0.0
        %346 = vmatpush1.msra.mxu0 0.0
        %347 = vmatprep.subr.mxu0 0.0
        %348 = vmatpush1.msra.mxu0 0.0
        %349 = vmatprep.subr.mxu0 0.0
        %350 = vmatpush1.msra.mxu0 0.0
        %351 = vmatprep.subr.mxu0 0.0
        %352 = vmatpush1.msra.mxu0 0.0
        %353 = vmatprep.subr.mxu0 0.0
        %354 = vmatpush1.msra.mxu0 0.0
        %355 = vmatprep.subr.mxu0 0.0
        %356 = vmatpush1.msra.mxu0 0.0
        %357 = vmatprep.subr.mxu0 0.0
        %358 = vmatpush1.msra.mxu0 0.0
        %359 = vmatprep.subr.mxu0 0.0
        %360 = vmatpush1.msra.mxu0 0.0
        %361 = vmatprep.subr.mxu0 0.0
        %362 = vmatpush1.msra.mxu0 0.0
        %363 = vmatprep.mubr.f32.mxu0 0.0
        %364 = vmatmul.mubr.f32.gmra.mrb[0].mxu0 %v283
        %v365 = vpop.f32.mrb[0].mxu0
        %v366 = vadd.f32 0.0, %v365
        %v367 = vpop.f32.mrb[0].mxu0
        %v368 = vadd.f32 0.0, %v367
        %369 = vmatprep.mubr.f32.mxu0 0.0
        %370 = vmatmul.mubr.f32.gmra.mrb[0].mxu0 %v286
        %v371 = vpop.f32.mrb[0].mxu0
        %v372 = vadd.f32 0.0, %v371
        %v373 = vpop.f32.mrb[0].mxu0
        %v374 = vadd.f32 0.0, %v373
        %375 = vmatprep.mubr.f32.mxu0 0.0
        %376 = vmatmul.mubr.f32.gmra.mrb[0].mxu0 %v289
        %v377 = vpop.f32.mrb[0].mxu0
        %v378 = vadd.f32 0.0, %v377
        %v379 = vpop.f32.mrb[0].mxu0
        %v380 = vadd.f32 0.0, %v379
        %381 = vmatprep.mubr.f32.mxu0 0.0
        %382 = vmatmul.mubr.f32.gmra.mrb[0].mxu0 %v292
        %v383 = vpop.f32.mrb[0].mxu0
        %v384 = vadd.f32 0.0, %v383
        %v385 = vpop.f32.mrb[0].mxu0
        %v386 = vadd.f32 0.0, %v385
        %387 = vdwg.mxu0
        %v390 = vcombine.high %v237, %v237
        %391 = vrot.lane.b32.xlu0 %v237, 17
        %v392 = vpop.permute.xlu0 %391
        %393 = vrot.lane.b32.xlu0 %v390, 17
        %v394 = vpop.permute.xlu0 %393
        %395 = vrot.lane.b32.xlu0 %v238, 17
        %v396 = vpop.permute.xlu0 %395
        %vm397 = vcmask 138240
        %v398 = vsel %vm397, %v392, %v394
        %v399 = vsel %vm397, %v394, %v396
        %v401 = vsel %vm281, %v239, 0
        %v404 = vsel %vm281, %v240, 0
        %v407 = vsel %vm281, %v241, 0
        %v410 = vsel %vm281, %v242, 0
        %v412 = vsel %vm294, %v398, 0
        %v414 = vsel %vm294, %v399, 0
        %416 = vmatprep.subr.mxu0 %v414
        %417 = vmatpush1.msra.mxu0 %v412
        %418 = vmatprep.subr.mxu0 0.0
        %419 = vmatpush1.msra.mxu0 0.0
        %420 = vmatprep.subr.mxu0 0.0
        %421 = vmatpush1.msra.mxu0 0.0
        %422 = vmatprep.subr.mxu0 0.0
        %423 = vmatpush1.msra.mxu0 0.0
        %424 = vmatprep.subr.mxu0 0.0
        %425 = vmatpush1.msra.mxu0 0.0
        %426 = vmatprep.subr.mxu0 0.0
        %427 = vmatpush1.msra.mxu0 0.0
        %428 = vmatprep.subr.mxu0 0.0
        %429 = vmatpush1.msra.mxu0 0.0
        %430 = vmatprep.subr.mxu0 0.0
        %431 = vmatpush1.msra.mxu0 0.0
        %432 = vmatprep.subr.mxu0 0.0
        %433 = vmatpush1.msra.mxu0 0.0
        %434 = vmatprep.subr.mxu0 0.0
        %435 = vmatpush1.msra.mxu0 0.0
        %436 = vmatprep.subr.mxu0 0.0
        %437 = vmatpush1.msra.mxu0 0.0
        %438 = vmatprep.subr.mxu0 0.0
        %439 = vmatpush1.msra.mxu0 0.0
        %440 = vmatprep.subr.mxu0 0.0
        %441 = vmatpush1.msra.mxu0 0.0
        %442 = vmatprep.subr.mxu0 0.0
        %443 = vmatpush1.msra.mxu0 0.0
        %444 = vmatprep.subr.mxu0 0.0
        %445 = vmatpush1.msra.mxu0 0.0
        %446 = vmatprep.subr.mxu0 0.0
        %447 = vmatpush1.msra.mxu0 0.0
        %448 = vmatprep.subr.mxu0 0.0
        %449 = vmatpush1.msra.mxu0 0.0
        %450 = vmatprep.subr.mxu0 0.0
        %451 = vmatpush1.msra.mxu0 0.0
        %452 = vmatprep.subr.mxu0 0.0
        %453 = vmatpush1.msra.mxu0 0.0
        %454 = vmatprep.subr.mxu0 0.0
        %455 = vmatpush1.msra.mxu0 0.0
        %456 = vmatprep.subr.mxu0 0.0
        %457 = vmatpush1.msra.mxu0 0.0
        %458 = vmatprep.subr.mxu0 0.0
        %459 = vmatpush1.msra.mxu0 0.0
        %460 = vmatprep.subr.mxu0 0.0
        %461 = vmatpush1.msra.mxu0 0.0
        %462 = vmatprep.subr.mxu0 0.0
        %463 = vmatpush1.msra.mxu0 0.0
        %464 = vmatprep.subr.mxu0 0.0
        %465 = vmatpush1.msra.mxu0 0.0
        %466 = vmatprep.subr.mxu0 0.0
        %467 = vmatpush1.msra.mxu0 0.0
        %468 = vmatprep.subr.mxu0 0.0
        %469 = vmatpush1.msra.mxu0 0.0
        %470 = vmatprep.subr.mxu0 0.0
        %471 = vmatpush1.msra.mxu0 0.0
        %472 = vmatprep.subr.mxu0 0.0
        %473 = vmatpush1.msra.mxu0 0.0
        %474 = vmatprep.subr.mxu0 0.0
        %475 = vmatpush1.msra.mxu0 0.0
        %476 = vmatprep.subr.mxu0 0.0
        %477 = vmatpush1.msra.mxu0 0.0
        %478 = vmatprep.subr.mxu0 0.0
        %479 = vmatpush1.msra.mxu0 0.0
        %480 = vmatprep.mubr.f32.mxu0 0.0
        %481 = vmatmul.mubr.f32.gmra.mrb[0].mxu0 %v401
        %v482 = vpop.f32.mrb[0].mxu0
        %v483 = vadd.f32 %v366, %v482
        %v484 = vpop.f32.mrb[0].mxu0
        %v485 = vadd.f32 %v368, %v484
        %486 = vmatprep.mubr.f32.mxu0 0.0
        %487 = vmatmul.mubr.f32.gmra.mrb[0].mxu0 %v404
        %v488 = vpop.f32.mrb[0].mxu0
        %v489 = vadd.f32 %v372, %v488
        %v490 = vpop.f32.mrb[0].mxu0
        %v491 = vadd.f32 %v374, %v490
        %492 = vmatprep.mubr.f32.mxu0 0.0
        %493 = vmatmul.mubr.f32.gmra.mrb[0].mxu0 %v407
        %v494 = vpop.f32.mrb[0].mxu0
        %v495 = vadd.f32 %v378, %v494
        %v496 = vpop.f32.mrb[0].mxu0
        %v497 = vadd.f32 %v380, %v496
        %498 = vmatprep.mubr.f32.mxu0 0.0
        %499 = vmatmul.mubr.f32.gmra.mrb[0].mxu0 %v410
        %v500 = vpop.f32.mrb[0].mxu0
        %v501 = vadd.f32 %v384, %v500
        %v502 = vpop.f32.mrb[0].mxu0
        %v503 = vadd.f32 %v386, %v502
        %504 = vdwg.mxu0
        %v505 = vld [vmem:[#allocation2] sm:$0xff]
        %v506 = vld [vmem:[#allocation2 + $0x8] sm:$0xf]
        %s507 = scalar_lea.vmem %s2, 4
        %v508 = vld [vmem:[%s507] sm:$0x3]
        %v510 = vlaneseq
        %v511 = vshrl.u32 %v510, 7
        %v512 = vsub.s32 0, %v511
        %v513 = vrot.slane %v508, %v512
        %v514 = vlaneseq
        %v515 = vshrl.u32 %v514, 7
        %v516 = vsub.s32 1, %v515
        %v517 = vrot.slane %v508, %v516
        %v518 = vcombine.low %v513, %v517
        %519 = vrot.lane.b32.xlu0 %v518, 113
        %v520 = vpop.permute.xlu0 %519
        %v521 = vrot.slane %v520, 4
        %vm522 = vcmask 924672
        %v523 = vsel %vm522, %v521, %v520
        %v526 = vmul.f32 %v505, %v523
        %v527 = vmul.f32 %v506, %v521
        %s528 = scalar_lea.vmem %s1, 64
        %v529 = vld [vmem:[%s528] sm:$0xff]
        %v530 = vld [vmem:[%s528 + $0x8] sm:$0xff]
        %v531 = vld [vmem:[%s528 + $0x10] sm:$0xff]
        %v532 = vld [vmem:[%s528 + $0x18] sm:$0xff]
        %v535 = vcombine.high %v526, %v526
        %536 = vrot.lane.b32.xlu0 %v526, 15
        %v537 = vpop.permute.xlu0 %536
        %538 = vrot.lane.b32.xlu0 %v535, 15
        %v539 = vpop.permute.xlu0 %538
        %540 = vrot.lane.b32.xlu0 %v527, 15
        %v541 = vpop.permute.xlu0 %540
        %vm542 = vcmask 121856
        %v543 = vsel %vm542, %v537, %v539
        %v544 = vsel %vm542, %v539, %v541
        %v546 = vsel %vm281, %v529, 0
        %v549 = vsel %vm281, %v530, 0
        %v552 = vsel %vm281, %v531, 0
        %v555 = vsel %vm281, %v532, 0
        %v557 = vsel %vm294, %v543, 0
        %v559 = vsel %vm294, %v544, 0
        %561 = vmatprep.subr.mxu0 %v559
        %562 = vmatpush1.msra.mxu0 %v557
        %563 = vmatprep.subr.mxu0 0.0
        %564 = vmatpush1.msra.mxu0 0.0
        %565 = vmatprep.subr.mxu0 0.0
        %566 = vmatpush1.msra.mxu0 0.0
        %567 = vmatprep.subr.mxu0 0.0
        %568 = vmatpush1.msra.mxu0 0.0
        %569 = vmatprep.subr.mxu0 0.0
        %570 = vmatpush1.msra.mxu0 0.0
        %571 = vmatprep.subr.mxu0 0.0
        %572 = vmatpush1.msra.mxu0 0.0
        %573 = vmatprep.subr.mxu0 0.0
        %574 = vmatpush1.msra.mxu0 0.0
        %575 = vmatprep.subr.mxu0 0.0
        %576 = vmatpush1.msra.mxu0 0.0
        %577 = vmatprep.subr.mxu0 0.0
        %578 = vmatpush1.msra.mxu0 0.0
        %579 = vmatprep.subr.mxu0 0.0
        %580 = vmatpush1.msra.mxu0 0.0
        %581 = vmatprep.subr.mxu0 0.0
        %582 = vmatpush1.msra.mxu0 0.0
        %583 = vmatprep.subr.mxu0 0.0
        %584 = vmatpush1.msra.mxu0 0.0
        %585 = vmatprep.subr.mxu0 0.0
        %586 = vmatpush1.msra.mxu0 0.0
        %587 = vmatprep.subr.mxu0 0.0
        %588 = vmatpush1.msra.mxu0 0.0
        %589 = vmatprep.subr.mxu0 0.0
        %590 = vmatpush1.msra.mxu0 0.0
        %591 = vmatprep.subr.mxu0 0.0
        %592 = vmatpush1.msra.mxu0 0.0
        %593 = vmatprep.subr.mxu0 0.0
        %594 = vmatpush1.msra.mxu0 0.0
        %595 = vmatprep.subr.mxu0 0.0
        %596 = vmatpush1.msra.mxu0 0.0
        %597 = vmatprep.subr.mxu0 0.0
        %598 = vmatpush1.msra.mxu0 0.0
        %599 = vmatprep.subr.mxu0 0.0
        %600 = vmatpush1.msra.mxu0 0.0
        %601 = vmatprep.subr.mxu0 0.0
        %602 = vmatpush1.msra.mxu0 0.0
        %603 = vmatprep.subr.mxu0 0.0
        %604 = vmatpush1.msra.mxu0 0.0
        %605 = vmatprep.subr.mxu0 0.0
        %606 = vmatpush1.msra.mxu0 0.0
        %607 = vmatprep.subr.mxu0 0.0
        %608 = vmatpush1.msra.mxu0 0.0
        %609 = vmatprep.subr.mxu0 0.0
        %610 = vmatpush1.msra.mxu0 0.0
        %611 = vmatprep.subr.mxu0 0.0
        %612 = vmatpush1.msra.mxu0 0.0
        %613 = vmatprep.subr.mxu0 0.0
        %614 = vmatpush1.msra.mxu0 0.0
        %615 = vmatprep.subr.mxu0 0.0
        %616 = vmatpush1.msra.mxu0 0.0
        %617 = vmatprep.subr.mxu0 0.0
        %618 = vmatpush1.msra.mxu0 0.0
        %619 = vmatprep.subr.mxu0 0.0
        %620 = vmatpush1.msra.mxu0 0.0
        %621 = vmatprep.subr.mxu0 0.0
        %622 = vmatpush1.msra.mxu0 0.0
        %623 = vmatprep.subr.mxu0 0.0
        %624 = vmatpush1.msra.mxu0 0.0
        %625 = vmatprep.mubr.f32.mxu0 0.0
        %626 = vmatmul.mubr.f32.gmra.mrb[0].mxu0 %v546
        %v627 = vpop.f32.mrb[0].mxu0
        %v628 = vadd.f32 0.0, %v627
        %v629 = vpop.f32.mrb[0].mxu0
        %v630 = vadd.f32 0.0, %v629
        %631 = vmatprep.mubr.f32.mxu0 0.0
        %632 = vmatmul.mubr.f32.gmra.mrb[0].mxu0 %v549
        %v633 = vpop.f32.mrb[0].mxu0
        %v634 = vadd.f32 0.0, %v633
        %v635 = vpop.f32.mrb[0].mxu0
        %v636 = vadd.f32 0.0, %v635
        %637 = vmatprep.mubr.f32.mxu0 0.0
        %638 = vmatmul.mubr.f32.gmra.mrb[0].mxu0 %v552
        %v639 = vpop.f32.mrb[0].mxu0
        %v640 = vadd.f32 0.0, %v639
        %v641 = vpop.f32.mrb[0].mxu0
        %v642 = vadd.f32 0.0, %v641
        %643 = vmatprep.mubr.f32.mxu0 0.0
        %644 = vmatmul.mubr.f32.gmra.mrb[0].mxu0 %v555
        %v645 = vpop.f32.mrb[0].mxu0
        %v646 = vadd.f32 0.0, %v645
        %v647 = vpop.f32.mrb[0].mxu0
        %v648 = vadd.f32 0.0, %v647
        %649 = vdwg.mxu0
        %v650 = vadd.f32 %v483, %v628
        %v651 = vadd.f32 %v485, %v630
        %v652 = vadd.f32 %v489, %v634
        %v653 = vadd.f32 %v491, %v636
        %v654 = vadd.f32 %v495, %v640
        %v655 = vadd.f32 %v497, %v642
        %v656 = vadd.f32 %v501, %v646
        %v657 = vadd.f32 %v503, %v648
        %v658 = vld [vmem:[#allocation2] sm:$0xff]
        %v659 = vld [vmem:[#allocation2 + $0x8] sm:$0xf]
        %s660 = scalar_lea.vmem %s2, 6
        %v661 = vld [vmem:[%s660] sm:$0x3]
        %v663 = vlaneseq
        %v664 = vshrl.u32 %v663, 7
        %v665 = vsub.s32 0, %v664
        %v666 = vrot.slane %v661, %v665
        %v667 = vlaneseq
        %v668 = vshrl.u32 %v667, 7
        %v669 = vsub.s32 1, %v668
        %v670 = vrot.slane %v661, %v669
        %v671 = vcombine.low %v666, %v670
        %672 = vrot.lane.b32.xlu0 %v671, 127
        %v673 = vpop.permute.xlu0 %672
        %v674 = vrot.slane %v673, 4
        %vm675 = vcmask 1039360
        %v676 = vsel %vm675, %v674, %v673
        %v679 = vmul.f32 %v658, %v676
        %v680 = vmul.f32 %v659, %v674
        %s681 = scalar_lea.vmem %s1, 96
        %v682 = vld [vmem:[%s681] sm:$0xff]
        %v683 = vld [vmem:[%s681 + $0x8] sm:$0xff]
        %v684 = vld [vmem:[%s681 + $0x10] sm:$0xff]
        %v685 = vld [vmem:[%s681 + $0x18] sm:$0xff]
        %v688 = vcombine.high %v679, %v679
        %689 = vrot.lane.b32.xlu0 %v679, 1
        %v690 = vpop.permute.xlu0 %689
        %691 = vrot.lane.b32.xlu0 %v688, 1
        %v692 = vpop.permute.xlu0 %691
        %693 = vrot.lane.b32.xlu0 %v680, 1
        %v694 = vpop.permute.xlu0 %693
        %vm695 = vcmask 7168
        %v696 = vsel %vm695, %v690, %v692
        %v697 = vsel %vm695, %v692, %v694
        %v699 = vsel %vm281, %v682, 0
        %v702 = vsel %vm281, %v683, 0
        %v705 = vsel %vm281, %v684, 0
        %v708 = vsel %vm281, %v685, 0
        %v710 = vsel %vm294, %v696, 0
        %v712 = vsel %vm294, %v697, 0
        %714 = vmatprep.subr.mxu0 %v712
        %715 = vmatpush1.msra.mxu0 %v710
        %716 = vmatprep.subr.mxu0 0.0
        %717 = vmatpush1.msra.mxu0 0.0
        %718 = vmatprep.subr.mxu0 0.0
        %719 = vmatpush1.msra.mxu0 0.0
        %720 = vmatprep.subr.mxu0 0.0
        %721 = vmatpush1.msra.mxu0 0.0
        %722 = vmatprep.subr.mxu0 0.0
        %723 = vmatpush1.msra.mxu0 0.0
        %724 = vmatprep.subr.mxu0 0.0
        %725 = vmatpush1.msra.mxu0 0.0
        %726 = vmatprep.subr.mxu0 0.0
        %727 = vmatpush1.msra.mxu0 0.0
        %728 = vmatprep.subr.mxu0 0.0
        %729 = vmatpush1.msra.mxu0 0.0
        %730 = vmatprep.subr.mxu0 0.0
        %731 = vmatpush1.msra.mxu0 0.0
        %732 = vmatprep.subr.mxu0 0.0
        %733 = vmatpush1.msra.mxu0 0.0
        %734 = vmatprep.subr.mxu0 0.0
        %735 = vmatpush1.msra.mxu0 0.0
        %736 = vmatprep.subr.mxu0 0.0
        %737 = vmatpush1.msra.mxu0 0.0
        %738 = vmatprep.subr.mxu0 0.0
        %739 = vmatpush1.msra.mxu0 0.0
        %740 = vmatprep.subr.mxu0 0.0
        %741 = vmatpush1.msra.mxu0 0.0
        %742 = vmatprep.subr.mxu0 0.0
        %743 = vmatpush1.msra.mxu0 0.0
        %744 = vmatprep.subr.mxu0 0.0
        %745 = vmatpush1.msra.mxu0 0.0
        %746 = vmatprep.subr.mxu0 0.0
        %747 = vmatpush1.msra.mxu0 0.0
        %748 = vmatprep.subr.mxu0 0.0
        %749 = vmatpush1.msra.mxu0 0.0
        %750 = vmatprep.subr.mxu0 0.0
        %751 = vmatpush1.msra.mxu0 0.0
        %752 = vmatprep.subr.mxu0 0.0
        %753 = vmatpush1.msra.mxu0 0.0
        %754 = vmatprep.subr.mxu0 0.0
        %755 = vmatpush1.msra.mxu0 0.0
        %756 = vmatprep.subr.mxu0 0.0
        %757 = vmatpush1.msra.mxu0 0.0
        %758 = vmatprep.subr.mxu0 0.0
        %759 = vmatpush1.msra.mxu0 0.0
        %760 = vmatprep.subr.mxu0 0.0
        %761 = vmatpush1.msra.mxu0 0.0
        %762 = vmatprep.subr.mxu0 0.0
        %763 = vmatpush1.msra.mxu0 0.0
        %764 = vmatprep.subr.mxu0 0.0
        %765 = vmatpush1.msra.mxu0 0.0
        %766 = vmatprep.subr.mxu0 0.0
        %767 = vmatpush1.msra.mxu0 0.0
        %768 = vmatprep.subr.mxu0 0.0
        %769 = vmatpush1.msra.mxu0 0.0
        %770 = vmatprep.subr.mxu0 0.0
        %771 = vmatpush1.msra.mxu0 0.0
        %772 = vmatprep.subr.mxu0 0.0
        %773 = vmatpush1.msra.mxu0 0.0
        %774 = vmatprep.subr.mxu0 0.0
        %775 = vmatpush1.msra.mxu0 0.0
        %776 = vmatprep.subr.mxu0 0.0
        %777 = vmatpush1.msra.mxu0 0.0
        %778 = vmatprep.mubr.f32.mxu0 0.0
        %779 = vmatmul.mubr.f32.gmra.mrb[0].mxu0 %v699
        %v780 = vpop.f32.mrb[0].mxu0
        %v781 = vadd.f32 0.0, %v780
        %v782 = vpop.f32.mrb[0].mxu0
        %v783 = vadd.f32 0.0, %v782
        %784 = vmatprep.mubr.f32.mxu0 0.0
        %785 = vmatmul.mubr.f32.gmra.mrb[0].mxu0 %v702
        %v786 = vpop.f32.mrb[0].mxu0
        %v787 = vadd.f32 0.0, %v786
        %v788 = vpop.f32.mrb[0].mxu0
        %v789 = vadd.f32 0.0, %v788
        %790 = vmatprep.mubr.f32.mxu0 0.0
        %791 = vmatmul.mubr.f32.gmra.mrb[0].mxu0 %v705
        %v792 = vpop.f32.mrb[0].mxu0
        %v793 = vadd.f32 0.0, %v792
        %v794 = vpop.f32.mrb[0].mxu0
        %v795 = vadd.f32 0.0, %v794
        %796 = vmatprep.mubr.f32.mxu0 0.0
        %797 = vmatmul.mubr.f32.gmra.mrb[0].mxu0 %v708
        %v798 = vpop.f32.mrb[0].mxu0
        %v799 = vadd.f32 0.0, %v798
        %v800 = vpop.f32.mrb[0].mxu0
        %v801 = vadd.f32 0.0, %v800
        %802 = vdwg.mxu0
        %v803 = vadd.f32 %v650, %v781
        %v804 = vadd.f32 %v651, %v783
        %v805 = vadd.f32 %v652, %v787
        %v806 = vadd.f32 %v653, %v789
        %v807 = vadd.f32 %v654, %v793
        %v808 = vadd.f32 %v655, %v795
        %v809 = vadd.f32 %v656, %v799
        %v810 = vadd.f32 %v657, %v801
        %v811 = vld [vmem:[#allocation2 + $0x4] sm:$0xff]
        %s812 = scalar_lea.vmem %s1, 128
        %v813 = vld [vmem:[%s812] sm:$0xff]
        %v814 = vld [vmem:[%s812 + $0x8] sm:$0xff]
        %v815 = vld [vmem:[%s812 + $0x10] sm:$0xff]
        %v816 = vld [vmem:[%s812 + $0x18] sm:$0xff]
        %v818 = vcombine.high %v811, %v811
        %v820 = vsel %vm281, %v813, 0
        %v823 = vsel %vm281, %v814, 0
        %v826 = vsel %vm281, %v815, 0
        %v829 = vsel %vm281, %v816, 0
        %v831 = vsel %vm294, %v811, 0
        %v833 = vsel %vm294, %v818, 0
        %835 = vmatprep.subr.mxu0 %v833
        %836 = vmatpush1.msra.mxu0 %v831
        %837 = vmatprep.subr.mxu0 0.0
        %838 = vmatpush1.msra.mxu0 0.0
        %839 = vmatprep.subr.mxu0 0.0
        %840 = vmatpush1.msra.mxu0 0.0
        %841 = vmatprep.subr.mxu0 0.0
        %842 = vmatpush1.msra.mxu0 0.0
        %843 = vmatprep.subr.mxu0 0.0
        %844 = vmatpush1.msra.mxu0 0.0
        %845 = vmatprep.subr.mxu0 0.0
        %846 = vmatpush1.msra.mxu0 0.0
        %847 = vmatprep.subr.mxu0 0.0
        %848 = vmatpush1.msra.mxu0 0.0
        %849 = vmatprep.subr.mxu0 0.0
        %850 = vmatpush1.msra.mxu0 0.0
        %851 = vmatprep.subr.mxu0 0.0
        %852 = vmatpush1.msra.mxu0 0.0
        %853 = vmatprep.subr.mxu0 0.0
        %854 = vmatpush1.msra.mxu0 0.0
        %855 = vmatprep.subr.mxu0 0.0
        %856 = vmatpush1.msra.mxu0 0.0
        %857 = vmatprep.subr.mxu0 0.0
        %858 = vmatpush1.msra.mxu0 0.0
        %859 = vmatprep.subr.mxu0 0.0
        %860 = vmatpush1.msra.mxu0 0.0
        %861 = vmatprep.subr.mxu0 0.0
        %862 = vmatpush1.msra.mxu0 0.0
        %863 = vmatprep.subr.mxu0 0.0
        %864 = vmatpush1.msra.mxu0 0.0
        %865 = vmatprep.subr.mxu0 0.0
        %866 = vmatpush1.msra.mxu0 0.0
        %867 = vmatprep.subr.mxu0 0.0
        %868 = vmatpush1.msra.mxu0 0.0
        %869 = vmatprep.subr.mxu0 0.0
        %870 = vmatpush1.msra.mxu0 0.0
        %871 = vmatprep.subr.mxu0 0.0
        %872 = vmatpush1.msra.mxu0 0.0
        %873 = vmatprep.subr.mxu0 0.0
        %874 = vmatpush1.msra.mxu0 0.0
        %875 = vmatprep.subr.mxu0 0.0
        %876 = vmatpush1.msra.mxu0 0.0
        %877 = vmatprep.subr.mxu0 0.0
        %878 = vmatpush1.msra.mxu0 0.0
        %879 = vmatprep.subr.mxu0 0.0
        %880 = vmatpush1.msra.mxu0 0.0
        %881 = vmatprep.subr.mxu0 0.0
        %882 = vmatpush1.msra.mxu0 0.0
        %883 = vmatprep.subr.mxu0 0.0
        %884 = vmatpush1.msra.mxu0 0.0
        %885 = vmatprep.subr.mxu0 0.0
        %886 = vmatpush1.msra.mxu0 0.0
        %887 = vmatprep.subr.mxu0 0.0
        %888 = vmatpush1.msra.mxu0 0.0
        %889 = vmatprep.subr.mxu0 0.0
        %890 = vmatpush1.msra.mxu0 0.0
        %891 = vmatprep.subr.mxu0 0.0
        %892 = vmatpush1.msra.mxu0 0.0
        %893 = vmatprep.subr.mxu0 0.0
        %894 = vmatpush1.msra.mxu0 0.0
        %895 = vmatprep.subr.mxu0 0.0
        %896 = vmatpush1.msra.mxu0 0.0
        %897 = vmatprep.subr.mxu0 0.0
        %898 = vmatpush1.msra.mxu0 0.0
        %899 = vmatprep.mubr.f32.mxu0 0.0
        %900 = vmatmul.mubr.f32.gmra.mrb[0].mxu0 %v820
        %v901 = vpop.f32.mrb[0].mxu0
        %v902 = vadd.f32 0.0, %v901
        %v903 = vpop.f32.mrb[0].mxu0
        %v904 = vadd.f32 0.0, %v903
        %905 = vmatprep.mubr.f32.mxu0 0.0
        %906 = vmatmul.mubr.f32.gmra.mrb[0].mxu0 %v823
        %v907 = vpop.f32.mrb[0].mxu0
        %v908 = vadd.f32 0.0, %v907
        %v909 = vpop.f32.mrb[0].mxu0
        %v910 = vadd.f32 0.0, %v909
        %911 = vmatprep.mubr.f32.mxu0 0.0
        %912 = vmatmul.mubr.f32.gmra.mrb[0].mxu0 %v826
        %v913 = vpop.f32.mrb[0].mxu0
        %v914 = vadd.f32 0.0, %v913
        %v915 = vpop.f32.mrb[0].mxu0
        %v916 = vadd.f32 0.0, %v915
        %917 = vmatprep.mubr.f32.mxu0 0.0
        %918 = vmatmul.mubr.f32.gmra.mrb[0].mxu0 %v829
        %v919 = vpop.f32.mrb[0].mxu0
        %v920 = vadd.f32 0.0, %v919
        %v921 = vpop.f32.mrb[0].mxu0
        %v922 = vadd.f32 0.0, %v921
        %923 = vdwg.mxu0
        %v924 = vadd.f32 %v803, %v902
        %v925 = vadd.f32 %v804, %v904
        %v926 = vadd.f32 %v805, %v908
        %v927 = vadd.f32 %v806, %v910
        %v928 = vadd.f32 %v807, %v914
        %v929 = vadd.f32 %v808, %v916
        %v930 = vadd.f32 %v809, %v920
        %v931 = vadd.f32 %v810, %v922
        %v932 = vld [vmem:[#allocation2 + $0x4] sm:$0xff]
        %v933 = vld [vmem:[#allocation2 + $0xc] sm:$0xf]
        %s934 = scalar_lea.vmem %s2, 10
        %v935 = vld [vmem:[%s934] sm:$0x3]
        %v937 = vlaneseq
        %v938 = vshrl.u32 %v937, 7
        %v939 = vsub.s32 0, %v938
        %v940 = vrot.slane %v935, %v939
        %v941 = vlaneseq
        %v942 = vshrl.u32 %v941, 7
        %v943 = vsub.s32 1, %v942
        %v944 = vrot.slane %v935, %v943
        %v945 = vcombine.low %v940, %v944
        %946 = vrot.lane.b32.xlu0 %v945, 1
        %v947 = vpop.permute.xlu0 %946
        %v948 = vrot.slane %v947, 4
        %v949 = vsel %vm695, %v948, %v947
        %v952 = vmul.f32 %v932, %v949
        %v953 = vmul.f32 %v933, %v948
        %s954 = scalar_lea.vmem %s1, 160
        %v955 = vld [vmem:[%s954] sm:$0xff]
        %v956 = vld [vmem:[%s954 + $0x8] sm:$0xff]
        %v957 = vld [vmem:[%s954 + $0x10] sm:$0xff]
        %v958 = vld [vmem:[%s954 + $0x18] sm:$0xff]
        %v961 = vcombine.high %v952, %v952
        %962 = vrot.lane.b32.xlu0 %v952, 127
        %v963 = vpop.permute.xlu0 %962
        %964 = vrot.lane.b32.xlu0 %v961, 127
        %v965 = vpop.permute.xlu0 %964
        %966 = vrot.lane.b32.xlu0 %v953, 127
        %v967 = vpop.permute.xlu0 %966
        %v968 = vsel %vm675, %v963, %v965
        %v969 = vsel %vm675, %v965, %v967
        %v971 = vsel %vm281, %v955, 0
        %v974 = vsel %vm281, %v956, 0
        %v977 = vsel %vm281, %v957, 0
        %v980 = vsel %vm281, %v958, 0
        %v982 = vsel %vm294, %v968, 0
        %v984 = vsel %vm294, %v969, 0
        %986 = vmatprep.subr.mxu0 %v984
        %987 = vmatpush1.msra.mxu0 %v982
        %988 = vmatprep.subr.mxu0 0.0
        %989 = vmatpush1.msra.mxu0 0.0
        %990 = vmatprep.subr.mxu0 0.0
        %991 = vmatpush1.msra.mxu0 0.0
        %992 = vmatprep.subr.mxu0 0.0
        %993 = vmatpush1.msra.mxu0 0.0
        %994 = vmatprep.subr.mxu0 0.0
        %995 = vmatpush1.msra.mxu0 0.0
        %996 = vmatprep.subr.mxu0 0.0
        %997 = vmatpush1.msra.mxu0 0.0
        %998 = vmatprep.subr.mxu0 0.0
        %999 = vmatpush1.msra.mxu0 0.0
        %1000 = vmatprep.subr.mxu0 0.0
        %1001 = vmatpush1.msra.mxu0 0.0
        %1002 = vmatprep.subr.mxu0 0.0
        %1003 = vmatpush1.msra.mxu0 0.0
        %1004 = vmatprep.subr.mxu0 0.0
        %1005 = vmatpush1.msra.mxu0 0.0
        %1006 = vmatprep.subr.mxu0 0.0
        %1007 = vmatpush1.msra.mxu0 0.0
        %1008 = vmatprep.subr.mxu0 0.0
        %1009 = vmatpush1.msra.mxu0 0.0
        %1010 = vmatprep.subr.mxu0 0.0
        %1011 = vmatpush1.msra.mxu0 0.0
        %1012 = vmatprep.subr.mxu0 0.0
        %1013 = vmatpush1.msra.mxu0 0.0
        %1014 = vmatprep.subr.mxu0 0.0
        %1015 = vmatpush1.msra.mxu0 0.0
        %1016 = vmatprep.subr.mxu0 0.0
        %1017 = vmatpush1.msra.mxu0 0.0
        %1018 = vmatprep.subr.mxu0 0.0
        %1019 = vmatpush1.msra.mxu0 0.0
        %1020 = vmatprep.subr.mxu0 0.0
        %1021 = vmatpush1.msra.mxu0 0.0
        %1022 = vmatprep.subr.mxu0 0.0
        %1023 = vmatpush1.msra.mxu0 0.0
        %1024 = vmatprep.subr.mxu0 0.0
        %1025 = vmatpush1.msra.mxu0 0.0
        %1026 = vmatprep.subr.mxu0 0.0
        %1027 = vmatpush1.msra.mxu0 0.0
        %1028 = vmatprep.subr.mxu0 0.0
        %1029 = vmatpush1.msra.mxu0 0.0
        %1030 = vmatprep.subr.mxu0 0.0
        %1031 = vmatpush1.msra.mxu0 0.0
        %1032 = vmatprep.subr.mxu0 0.0
        %1033 = vmatpush1.msra.mxu0 0.0
        %1034 = vmatprep.subr.mxu0 0.0
        %1035 = vmatpush1.msra.mxu0 0.0
        %1036 = vmatprep.subr.mxu0 0.0
        %1037 = vmatpush1.msra.mxu0 0.0
        %1038 = vmatprep.subr.mxu0 0.0
        %1039 = vmatpush1.msra.mxu0 0.0
        %1040 = vmatprep.subr.mxu0 0.0
        %1041 = vmatpush1.msra.mxu0 0.0
        %1042 = vmatprep.subr.mxu0 0.0
        %1043 = vmatpush1.msra.mxu0 0.0
        %1044 = vmatprep.subr.mxu0 0.0
        %1045 = vmatpush1.msra.mxu0 0.0
        %1046 = vmatprep.subr.mxu0 0.0
        %1047 = vmatpush1.msra.mxu0 0.0
        %1048 = vmatprep.subr.mxu0 0.0
        %1049 = vmatpush1.msra.mxu0 0.0
        %1050 = vmatprep.mubr.f32.mxu0 0.0
        %1051 = vmatmul.mubr.f32.gmra.mrb[0].mxu0 %v971
        %v1052 = vpop.f32.mrb[0].mxu0
        %v1053 = vadd.f32 0.0, %v1052
        %v1054 = vpop.f32.mrb[0].mxu0
        %v1055 = vadd.f32 0.0, %v1054
        %1056 = vmatprep.mubr.f32.mxu0 0.0
        %1057 = vmatmul.mubr.f32.gmra.mrb[0].mxu0 %v974
        %v1058 = vpop.f32.mrb[0].mxu0
        %v1059 = vadd.f32 0.0, %v1058
        %v1060 = vpop.f32.mrb[0].mxu0
        %v1061 = vadd.f32 0.0, %v1060
        %1062 = vmatprep.mubr.f32.mxu0 0.0
        %1063 = vmatmul.mubr.f32.gmra.mrb[0].mxu0 %v977
        %v1064 = vpop.f32.mrb[0].mxu0
        %v1065 = vadd.f32 0.0, %v1064
        %v1066 = vpop.f32.mrb[0].mxu0
        %v1067 = vadd.f32 0.0, %v1066
        %1068 = vmatprep.mubr.f32.mxu0 0.0
        %1069 = vmatmul.mubr.f32.gmra.mrb[0].mxu0 %v980
        %v1070 = vpop.f32.mrb[0].mxu0
        %v1071 = vadd.f32 0.0, %v1070
        %v1072 = vpop.f32.mrb[0].mxu0
        %v1073 = vadd.f32 0.0, %v1072
        %1074 = vdwg.mxu0
        %v1075 = vadd.f32 %v924, %v1053
        %v1076 = vadd.f32 %v925, %v1055
        %v1077 = vadd.f32 %v926, %v1059
        %v1078 = vadd.f32 %v927, %v1061
        %v1079 = vadd.f32 %v928, %v1065
        %v1080 = vadd.f32 %v929, %v1067
        %v1081 = vadd.f32 %v930, %v1071
        %v1082 = vadd.f32 %v931, %v1073
        %v1083 = vld [vmem:[#allocation2 + $0x4] sm:$0xff]
        %v1084 = vld [vmem:[#allocation2 + $0xc] sm:$0xf]
        %s1085 = scalar_lea.vmem %s2, 12
        %v1086 = vld [vmem:[%s1085] sm:$0x3]
        %v1088 = vlaneseq
        %v1089 = vshrl.u32 %v1088, 7
        %v1090 = vsub.s32 0, %v1089
        %v1091 = vrot.slane %v1086, %v1090
        %v1092 = vlaneseq
        %v1093 = vshrl.u32 %v1092, 7
        %v1094 = vsub.s32 1, %v1093
        %v1095 = vrot.slane %v1086, %v1094
        %v1096 = vcombine.low %v1091, %v1095
        %1097 = vrot.lane.b32.xlu0 %v1096, 15
        %v1098 = vpop.permute.xlu0 %1097
        %v1099 = vrot.slane %v1098, 4
        %v1100 = vsel %vm542, %v1099, %v1098
        %v1103 = vmul.f32 %v1083, %v1100
        %v1104 = vmul.f32 %v1084, %v1099
        %s1105 = scalar_lea.vmem %s1, 192
        %v1106 = vld [vmem:[%s1105] sm:$0xff]
        %v1107 = vld [vmem:[%s1105 + $0x8] sm:$0xff]
        %v1108 = vld [vmem:[%s1105 + $0x10] sm:$0xff]
        %v1109 = vld [vmem:[%s1105 + $0x18] sm:$0xff]
        %v1112 = vcombine.high %v1103, %v1103
        %1113 = vrot.lane.b32.xlu0 %v1103, 113
        %v1114 = vpop.permute.xlu0 %1113
        %1115 = vrot.lane.b32.xlu0 %v1112, 113
        %v1116 = vpop.permute.xlu0 %1115
        %1117 = vrot.lane.b32.xlu0 %v1104, 113
        %v1118 = vpop.permute.xlu0 %1117
        %v1119 = vsel %vm522, %v1114, %v1116
        %v1120 = vsel %vm522, %v1116, %v1118
        %v1122 = vsel %vm281, %v1106, 0
        %v1125 = vsel %vm281, %v1107, 0
        %v1128 = vsel %vm281, %v1108, 0
        %v1131 = vsel %vm281, %v1109, 0
        %v1133 = vsel %vm294, %v1119, 0
        %v1135 = vsel %vm294, %v1120, 0
        %1137 = vmatprep.subr.mxu0 %v1135
        %1138 = vmatpush1.msra.mxu0 %v1133
        %1139 = vmatprep.subr.mxu0 0.0
        %1140 = vmatpush1.msra.mxu0 0.0
        %1141 = vmatprep.subr.mxu0 0.0
        %1142 = vmatpush1.msra.mxu0 0.0
        %1143 = vmatprep.subr.mxu0 0.0
        %1144 = vmatpush1.msra.mxu0 0.0
        %1145 = vmatprep.subr.mxu0 0.0
        %1146 = vmatpush1.msra.mxu0 0.0
        %1147 = vmatprep.subr.mxu0 0.0
        %1148 = vmatpush1.msra.mxu0 0.0
        %1149 = vmatprep.subr.mxu0 0.0
        %1150 = vmatpush1.msra.mxu0 0.0
        %1151 = vmatprep.subr.mxu0 0.0
        %1152 = vmatpush1.msra.mxu0 0.0
        %1153 = vmatprep.subr.mxu0 0.0
        %1154 = vmatpush1.msra.mxu0 0.0
        %1155 = vmatprep.subr.mxu0 0.0
        %1156 = vmatpush1.msra.mxu0 0.0
        %1157 = vmatprep.subr.mxu0 0.0
        %1158 = vmatpush1.msra.mxu0 0.0
        %1159 = vmatprep.subr.mxu0 0.0
        %1160 = vmatpush1.msra.mxu0 0.0
        %1161 = vmatprep.subr.mxu0 0.0
        %1162 = vmatpush1.msra.mxu0 0.0
        %1163 = vmatprep.subr.mxu0 0.0
        %1164 = vmatpush1.msra.mxu0 0.0
        %1165 = vmatprep.subr.mxu0 0.0
        %1166 = vmatpush1.msra.mxu0 0.0
        %1167 = vmatprep.subr.mxu0 0.0
        %1168 = vmatpush1.msra.mxu0 0.0
        %1169 = vmatprep.subr.mxu0 0.0
        %1170 = vmatpush1.msra.mxu0 0.0
        %1171 = vmatprep.subr.mxu0 0.0
        %1172 = vmatpush1.msra.mxu0 0.0
        %1173 = vmatprep.subr.mxu0 0.0
        %1174 = vmatpush1.msra.mxu0 0.0
        %1175 = vmatprep.subr.mxu0 0.0
        %1176 = vmatpush1.msra.mxu0 0.0
        %1177 = vmatprep.subr.mxu0 0.0
        %1178 = vmatpush1.msra.mxu0 0.0
        %1179 = vmatprep.subr.mxu0 0.0
        %1180 = vmatpush1.msra.mxu0 0.0
        %1181 = vmatprep.subr.mxu0 0.0
        %1182 = vmatpush1.msra.mxu0 0.0
        %1183 = vmatprep.subr.mxu0 0.0
        %1184 = vmatpush1.msra.mxu0 0.0
        %1185 = vmatprep.subr.mxu0 0.0
        %1186 = vmatpush1.msra.mxu0 0.0
        %1187 = vmatprep.subr.mxu0 0.0
        %1188 = vmatpush1.msra.mxu0 0.0
        %1189 = vmatprep.subr.mxu0 0.0
        %1190 = vmatpush1.msra.mxu0 0.0
        %1191 = vmatprep.subr.mxu0 0.0
        %1192 = vmatpush1.msra.mxu0 0.0
        %1193 = vmatprep.subr.mxu0 0.0
        %1194 = vmatpush1.msra.mxu0 0.0
        %1195 = vmatprep.subr.mxu0 0.0
        %1196 = vmatpush1.msra.mxu0 0.0
        %1197 = vmatprep.subr.mxu0 0.0
        %1198 = vmatpush1.msra.mxu0 0.0
        %1199 = vmatprep.subr.mxu0 0.0
        %1200 = vmatpush1.msra.mxu0 0.0
        %1201 = vmatprep.mubr.f32.mxu0 0.0
        %1202 = vmatmul.mubr.f32.gmra.mrb[0].mxu0 %v1122
        %v1203 = vpop.f32.mrb[0].mxu0
        %v1204 = vadd.f32 0.0, %v1203
        %v1205 = vpop.f32.mrb[0].mxu0
        %v1206 = vadd.f32 0.0, %v1205
        %1207 = vmatprep.mubr.f32.mxu0 0.0
        %1208 = vmatmul.mubr.f32.gmra.mrb[0].mxu0 %v1125
        %v1209 = vpop.f32.mrb[0].mxu0
        %v1210 = vadd.f32 0.0, %v1209
        %v1211 = vpop.f32.mrb[0].mxu0
        %v1212 = vadd.f32 0.0, %v1211
        %1213 = vmatprep.mubr.f32.mxu0 0.0
        %1214 = vmatmul.mubr.f32.gmra.mrb[0].mxu0 %v1128
        %v1215 = vpop.f32.mrb[0].mxu0
        %v1216 = vadd.f32 0.0, %v1215
        %v1217 = vpop.f32.mrb[0].mxu0
        %v1218 = vadd.f32 0.0, %v1217
        %1219 = vmatprep.mubr.f32.mxu0 0.0
        %1220 = vmatmul.mubr.f32.gmra.mrb[0].mxu0 %v1131
        %v1221 = vpop.f32.mrb[0].mxu0
        %v1222 = vadd.f32 0.0, %v1221
        %v1223 = vpop.f32.mrb[0].mxu0
        %v1224 = vadd.f32 0.0, %v1223
        %1225 = vdwg.mxu0
        %v1226 = vadd.f32 %v1075, %v1204
        %v1227 = vadd.f32 %v1076, %v1206
        %v1228 = vadd.f32 %v1077, %v1210
        %v1229 = vadd.f32 %v1078, %v1212
        %v1230 = vadd.f32 %v1079, %v1216
        %v1231 = vadd.f32 %v1080, %v1218
        %v1232 = vadd.f32 %v1081, %v1222
        %v1233 = vadd.f32 %v1082, %v1224
        %v1234 = vld [vmem:[#allocation2 + $0x4] sm:$0xff]
        %v1235 = vld [vmem:[#allocation2 + $0xc] sm:$0xf]
        %s1236 = scalar_lea.vmem %s2, 14
        %v1237 = vld [vmem:[%s1236] sm:$0x3]
        %v1239 = vlaneseq
        %v1240 = vshrl.u32 %v1239, 7
        %v1241 = vsub.s32 0, %v1240
        %v1242 = vrot.slane %v1237, %v1241
        %v1243 = vlaneseq
        %v1244 = vshrl.u32 %v1243, 7
        %v1245 = vsub.s32 1, %v1244
        %v1246 = vrot.slane %v1237, %v1245
        %v1247 = vcombine.low %v1242, %v1246
        %1248 = vrot.lane.b32.xlu0 %v1247, 16
        %v1249 = vpop.permute.xlu0 %1248
        %v1250 = vrot.slane %v1249, 4
        %v1251 = vsel %vm278, %v1250, %v1249
        %v1254 = vmul.f32 %v1234, %v1251
        %v1255 = vmul.f32 %v1235, %v1250
        %s1256 = scalar_lea.vmem %s1, 224
        %v1257 = vld [vmem:[%s1256] sm:$0xff]
        %v1258 = vld [vmem:[%s1256 + $0x8] sm:$0xff]
        %v1259 = vld [vmem:[%s1256 + $0x10] sm:$0xff]
        %v1260 = vld [vmem:[%s1256 + $0x18] sm:$0xff]
        %v1263 = vcombine.high %v1254, %v1254
        %1264 = vrot.lane.b32.xlu0 %v1254, 112
        %v1265 = vpop.permute.xlu0 %1264
        %1266 = vrot.lane.b32.xlu0 %v1263, 112
        %v1267 = vpop.permute.xlu0 %1266
        %1268 = vrot.lane.b32.xlu0 %v1255, 112
        %v1269 = vpop.permute.xlu0 %1268
        %v1270 = vsel %vm258, %v1265, %v1267
        %v1271 = vsel %vm258, %v1267, %v1269
        %v1273 = vsel %vm281, %v1257, 0
        %v1276 = vsel %vm281, %v1258, 0
        %v1279 = vsel %vm281, %v1259, 0
        %v1282 = vsel %vm281, %v1260, 0
        %v1284 = vsel %vm294, %v1270, 0
        %v1286 = vsel %vm294, %v1271, 0
        %1288 = vmatprep.subr.mxu0 %v1286
        %1289 = vmatpush1.msra.mxu0 %v1284
        %1290 = vmatprep.subr.mxu0 0.0
        %1291 = vmatpush1.msra.mxu0 0.0
        %1292 = vmatprep.subr.mxu0 0.0
        %1293 = vmatpush1.msra.mxu0 0.0
        %1294 = vmatprep.subr.mxu0 0.0
        %1295 = vmatpush1.msra.mxu0 0.0
        %1296 = vmatprep.subr.mxu0 0.0
        %1297 = vmatpush1.msra.mxu0 0.0
        %1298 = vmatprep.subr.mxu0 0.0
        %1299 = vmatpush1.msra.mxu0 0.0
        %1300 = vmatprep.subr.mxu0 0.0
        %1301 = vmatpush1.msra.mxu0 0.0
        %1302 = vmatprep.subr.mxu0 0.0
        %1303 = vmatpush1.msra.mxu0 0.0
        %1304 = vmatprep.subr.mxu0 0.0
        %1305 = vmatpush1.msra.mxu0 0.0
        %1306 = vmatprep.subr.mxu0 0.0
        %1307 = vmatpush1.msra.mxu0 0.0
        %1308 = vmatprep.subr.mxu0 0.0
        %1309 = vmatpush1.msra.mxu0 0.0
        %1310 = vmatprep.subr.mxu0 0.0
        %1311 = vmatpush1.msra.mxu0 0.0
        %1312 = vmatprep.subr.mxu0 0.0
        %1313 = vmatpush1.msra.mxu0 0.0
        %1314 = vmatprep.subr.mxu0 0.0
        %1315 = vmatpush1.msra.mxu0 0.0
        %1316 = vmatprep.subr.mxu0 0.0
        %1317 = vmatpush1.msra.mxu0 0.0
        %1318 = vmatprep.subr.mxu0 0.0
        %1319 = vmatpush1.msra.mxu0 0.0
        %1320 = vmatprep.subr.mxu0 0.0
        %1321 = vmatpush1.msra.mxu0 0.0
        %1322 = vmatprep.subr.mxu0 0.0
        %1323 = vmatpush1.msra.mxu0 0.0
        %1324 = vmatprep.subr.mxu0 0.0
        %1325 = vmatpush1.msra.mxu0 0.0
        %1326 = vmatprep.subr.mxu0 0.0
        %1327 = vmatpush1.msra.mxu0 0.0
        %1328 = vmatprep.subr.mxu0 0.0
        %1329 = vmatpush1.msra.mxu0 0.0
        %1330 = vmatprep.subr.mxu0 0.0
        %1331 = vmatpush1.msra.mxu0 0.0
        %1332 = vmatprep.subr.mxu0 0.0
        %1333 = vmatpush1.msra.mxu0 0.0
        %1334 = vmatprep.subr.mxu0 0.0
        %1335 = vmatpush1.msra.mxu0 0.0
        %1336 = vmatprep.subr.mxu0 0.0
        %1337 = vmatpush1.msra.mxu0 0.0
        %1338 = vmatprep.subr.mxu0 0.0
        %1339 = vmatpush1.msra.mxu0 0.0
        %1340 = vmatprep.subr.mxu0 0.0
        %1341 = vmatpush1.msra.mxu0 0.0
        %1342 = vmatprep.subr.mxu0 0.0
        %1343 = vmatpush1.msra.mxu0 0.0
        %1344 = vmatprep.subr.mxu0 0.0
        %1345 = vmatpush1.msra.mxu0 0.0
        %1346 = vmatprep.subr.mxu0 0.0
        %1347 = vmatpush1.msra.mxu0 0.0
        %1348 = vmatprep.subr.mxu0 0.0
        %1349 = vmatpush1.msra.mxu0 0.0
        %1350 = vmatprep.subr.mxu0 0.0
        %1351 = vmatpush1.msra.mxu0 0.0
        %1352 = vmatprep.mubr.f32.mxu0 0.0
        %1353 = vmatmul.mubr.f32.gmra.mrb[0].mxu0 %v1273
        %v1354 = vpop.f32.mrb[0].mxu0
        %v1355 = vadd.f32 0.0, %v1354
        %v1356 = vpop.f32.mrb[0].mxu0
        %v1357 = vadd.f32 0.0, %v1356
        %1358 = vmatprep.mubr.f32.mxu0 0.0
        %1359 = vmatmul.mubr.f32.gmra.mrb[0].mxu0 %v1276
        %v1360 = vpop.f32.mrb[0].mxu0
        %v1361 = vadd.f32 0.0, %v1360
        %v1362 = vpop.f32.mrb[0].mxu0
        %v1363 = vadd.f32 0.0, %v1362
        %1364 = vmatprep.mubr.f32.mxu0 0.0
        %1365 = vmatmul.mubr.f32.gmra.mrb[0].mxu0 %v1279
        %v1366 = vpop.f32.mrb[0].mxu0
        %v1367 = vadd.f32 0.0, %v1366
        %v1368 = vpop.f32.mrb[0].mxu0
        %v1369 = vadd.f32 0.0, %v1368
        %1370 = vmatprep.mubr.f32.mxu0 0.0
        %1371 = vmatmul.mubr.f32.gmra.mrb[0].mxu0 %v1282
        %v1372 = vpop.f32.mrb[0].mxu0
        %v1373 = vadd.f32 0.0, %v1372
        %v1374 = vpop.f32.mrb[0].mxu0
        %v1375 = vadd.f32 0.0, %v1374
        %1376 = vdwg.mxu0
        %v1377 = vadd.f32 %v1226, %v1355
        %v1378 = vadd.f32 %v1227, %v1357
        %v1379 = vadd.f32 %v1228, %v1361
        %v1380 = vadd.f32 %v1229, %v1363
        %v1381 = vadd.f32 %v1230, %v1367
        %v1382 = vadd.f32 %v1231, %v1369
        %v1383 = vadd.f32 %v1232, %v1373
        %v1384 = vadd.f32 %v1233, %v1375
        %v1385 = vld [vmem:[#allocation2 + $0x4] sm:$0xff]
        %v1386 = vld [vmem:[#allocation2 + $0xc] sm:$0xf]
        %s1387 = scalar_lea.vmem %s2, 16
        %v1388 = vld [vmem:[%s1387] sm:$0x3]
        %v1390 = vlaneseq
        %v1391 = vshrl.u32 %v1390, 7
        %v1392 = vsub.s32 0, %v1391
        %v1393 = vrot.slane %v1388, %v1392
        %v1394 = vlaneseq
        %v1395 = vshrl.u32 %v1394, 7
        %v1396 = vsub.s32 1, %v1395
        %v1397 = vrot.slane %v1388, %v1396
        %v1398 = vcombine.low %v1393, %v1397
        %1399 = vrot.lane.b32.xlu0 %v1398, 17
        %v1400 = vpop.permute.xlu0 %1399
        %v1401 = vrot.slane %v1400, 4
        %v1402 = vsel %vm397, %v1401, %v1400
        %v1405 = vmul.f32 %v1385, %v1402
        %v1406 = vmul.f32 %v1386, %v1401
        %s1407 = scalar_lea.vmem %s1, 256
        %v1408 = vld [vmem:[%s1407] sm:$0xff]
        %v1409 = vld [vmem:[%s1407 + $0x8] sm:$0xff]
        %v1410 = vld [vmem:[%s1407 + $0x10] sm:$0xff]
        %v1411 = vld [vmem:[%s1407 + $0x18] sm:$0xff]
        %v1414 = vcombine.high %v1405, %v1405
        %1415 = vrot.lane.b32.xlu0 %v1405, 111
        %v1416 = vpop.permute.xlu0 %1415
        %1417 = vrot.lane.b32.xlu0 %v1414, 111
        %v1418 = vpop.permute.xlu0 %1417
        %1419 = vrot.lane.b32.xlu0 %v1406, 111
        %v1420 = vpop.permute.xlu0 %1419
        %v1421 = vsel %vm233, %v1416, %v1418
        %v1422 = vsel %vm233, %v1418, %v1420
        %v1424 = vsel %vm281, %v1408, 0
        %v1427 = vsel %vm281, %v1409, 0
        %v1430 = vsel %vm281, %v1410, 0
        %v1433 = vsel %vm281, %v1411, 0
        %v1435 = vsel %vm294, %v1421, 0
        %v1437 = vsel %vm294, %v1422, 0
        %1439 = vmatprep.subr.mxu0 %v1437
        %1440 = vmatpush1.msra.mxu0 %v1435
        %1441 = vmatprep.subr.mxu0 0.0
        %1442 = vmatpush1.msra.mxu0 0.0
        %1443 = vmatprep.subr.mxu0 0.0
        %1444 = vmatpush1.msra.mxu0 0.0
        %1445 = vmatprep.subr.mxu0 0.0
        %1446 = vmatpush1.msra.mxu0 0.0
        %1447 = vmatprep.subr.mxu0 0.0
        %1448 = vmatpush1.msra.mxu0 0.0
        %1449 = vmatprep.subr.mxu0 0.0
        %1450 = vmatpush1.msra.mxu0 0.0
        %1451 = vmatprep.subr.mxu0 0.0
        %1452 = vmatpush1.msra.mxu0 0.0
        %1453 = vmatprep.subr.mxu0 0.0
        %1454 = vmatpush1.msra.mxu0 0.0
        %1455 = vmatprep.subr.mxu0 0.0
        %1456 = vmatpush1.msra.mxu0 0.0
        %1457 = vmatprep.subr.mxu0 0.0
        %1458 = vmatpush1.msra.mxu0 0.0
        %1459 = vmatprep.subr.mxu0 0.0
        %1460 = vmatpush1.msra.mxu0 0.0
        %1461 = vmatprep.subr.mxu0 0.0
        %1462 = vmatpush1.msra.mxu0 0.0
        %1463 = vmatprep.subr.mxu0 0.0
        %1464 = vmatpush1.msra.mxu0 0.0
        %1465 = vmatprep.subr.mxu0 0.0
        %1466 = vmatpush1.msra.mxu0 0.0
        %1467 = vmatprep.subr.mxu0 0.0
        %1468 = vmatpush1.msra.mxu0 0.0
        %1469 = vmatprep.subr.mxu0 0.0
        %1470 = vmatpush1.msra.mxu0 0.0
        %1471 = vmatprep.subr.mxu0 0.0
        %1472 = vmatpush1.msra.mxu0 0.0
        %1473 = vmatprep.subr.mxu0 0.0
        %1474 = vmatpush1.msra.mxu0 0.0
        %1475 = vmatprep.subr.mxu0 0.0
        %1476 = vmatpush1.msra.mxu0 0.0
        %1477 = vmatprep.subr.mxu0 0.0
        %1478 = vmatpush1.msra.mxu0 0.0
        %1479 = vmatprep.subr.mxu0 0.0
        %1480 = vmatpush1.msra.mxu0 0.0
        %1481 = vmatprep.subr.mxu0 0.0
        %1482 = vmatpush1.msra.mxu0 0.0
        %1483 = vmatprep.subr.mxu0 0.0
        %1484 = vmatpush1.msra.mxu0 0.0
        %1485 = vmatprep.subr.mxu0 0.0
        %1486 = vmatpush1.msra.mxu0 0.0
        %1487 = vmatprep.subr.mxu0 0.0
        %1488 = vmatpush1.msra.mxu0 0.0
        %1489 = vmatprep.subr.mxu0 0.0
        %1490 = vmatpush1.msra.mxu0 0.0
        %1491 = vmatprep.subr.mxu0 0.0
        %1492 = vmatpush1.msra.mxu0 0.0
        %1493 = vmatprep.subr.mxu0 0.0
        %1494 = vmatpush1.msra.mxu0 0.0
        %1495 = vmatprep.subr.mxu0 0.0
        %1496 = vmatpush1.msra.mxu0 0.0
        %1497 = vmatprep.subr.mxu0 0.0
        %1498 = vmatpush1.msra.mxu0 0.0
        %1499 = vmatprep.subr.mxu0 0.0
        %1500 = vmatpush1.msra.mxu0 0.0
        %1501 = vmatprep.subr.mxu0 0.0
        %1502 = vmatpush1.msra.mxu0 0.0
        %1503 = vmatprep.mubr.f32.mxu0 0.0
        %1504 = vmatmul.mubr.f32.gmra.mrb[0].mxu0 %v1424
        %v1505 = vpop.f32.mrb[0].mxu0
        %v1506 = vadd.f32 0.0, %v1505
        %v1507 = vpop.f32.mrb[0].mxu0
        %v1508 = vadd.f32 0.0, %v1507
        %1509 = vmatprep.mubr.f32.mxu0 0.0
        %1510 = vmatmul.mubr.f32.gmra.mrb[0].mxu0 %v1427
        %v1511 = vpop.f32.mrb[0].mxu0
        %v1512 = vadd.f32 0.0, %v1511
        %v1513 = vpop.f32.mrb[0].mxu0
        %v1514 = vadd.f32 0.0, %v1513
        %1515 = vmatprep.mubr.f32.mxu0 0.0
        %1516 = vmatmul.mubr.f32.gmra.mrb[0].mxu0 %v1430
        %v1517 = vpop.f32.mrb[0].mxu0
        %v1518 = vadd.f32 0.0, %v1517
        %v1519 = vpop.f32.mrb[0].mxu0
        %v1520 = vadd.f32 0.0, %v1519
        %1521 = vmatprep.mubr.f32.mxu0 0.0
        %1522 = vmatmul.mubr.f32.gmra.mrb[0].mxu0 %v1433
        %v1523 = vpop.f32.mrb[0].mxu0
        %v1524 = vadd.f32 0.0, %v1523
        %v1525 = vpop.f32.mrb[0].mxu0
        %v1526 = vadd.f32 0.0, %v1525
        %1527 = vdwg.mxu0
        %v1528 = vadd.f32 %v1377, %v1506
        %v1529 = vadd.f32 %v1378, %v1508
        %v1530 = vadd.f32 %v1379, %v1512
        %v1531 = vadd.f32 %v1380, %v1514
        %v1532 = vadd.f32 %v1381, %v1518
        %v1533 = vadd.f32 %v1382, %v1520
        %v1534 = vadd.f32 %v1383, %v1524
        %v1535 = vadd.f32 %v1384, %v1526
        %s1536 = sld [smem:[#allocation3 + $0x1]]
        %v1537 = vstv %s1536
        %v1538 = vadd.f32 %v1528, %v1537
        %v1539 = vadd.f32 %v1529, %v1537
        %v1540 = vadd.f32 %v1530, %v1537
        %v1541 = vadd.f32 %v1531, %v1537
        %v1542 = vadd.f32 %v1532, %v1537
        %v1543 = vadd.f32 %v1533, %v1537
        %v1544 = vadd.f32 %v1534, %v1537
        %v1545 = vadd.f32 %v1535, %v1537
        %v1546 = vmul.f32 %v1538, 0.01
        %v1547 = vmul.f32 %v1539, 0.01
        %v1548 = vmul.f32 %v1540, 0.01
        %v1549 = vmul.f32 %v1541, 0.01
        %v1550 = vmul.f32 %v1542, 0.01
        %v1551 = vmul.f32 %v1543, 0.01
        %v1552 = vmul.f32 %v1544, 0.01
        %v1553 = vmul.f32 %v1545, 0.01
        %v1554 = vmax.f32 %v1538, %v1546
        %v1555 = vmax.f32 %v1539, %v1547
        %v1556 = vmax.f32 %v1540, %v1548
        %v1557 = vmax.f32 %v1541, %v1549
        %v1558 = vmax.f32 %v1542, %v1550
        %v1559 = vmax.f32 %v1543, %v1551
        %v1560 = vmax.f32 %v1544, %v1552
        %v1561 = vmax.f32 %v1545, %v1553
        %1562 = vst [vmem:[%s204] sm:$0xff] %v1554
        %1563 = vst [vmem:[%s204 + $0x8] sm:$0xff] %v1555
        %1564 = vst [vmem:[%s204 + $0x10] sm:$0xff] %v1556
        %1565 = vst [vmem:[%s204 + $0x18] sm:$0xff] %v1557
        %1566 = vst [vmem:[%s204 + $0x20] sm:$0xff] %v1558
        %1567 = vst [vmem:[%s204 + $0x28] sm:$0xff] %v1559
        %1568 = vst [vmem:[%s204 + $0x30] sm:$0xff] %v1560
        %1569 = vst [vmem:[%s204 + $0x38] sm:$0xff] %v1561
        %s1570 = sand.u32 %s116, 1
        %s1571 = scalar_lea.sflag [#allocation4], %s1570
        %s1572 = sand.u32 %s116, 1
        %s1573 = smul.addr %s1572, 64
        %s1574 = scalar_lea.vmem [#allocation6], %s1573
        // Predicated region
        $region41: #{tpu_custom_call.1} parent=35 // pred_check
          %p1575 = pneg %p126
        $region42: #{tpu_custom_call.1} parent=35 // pred_check_branch
          %1577 = sbr.rel (%p1575) target = $region44
        $region43: #{tpu_custom_call.1} parent=35 // pred_region
          %s1579 = ssub.s32 1024, 1024
          %1580 = vsyncadd %s1571, %s1579
          %s1581 = smul.addr %s19, 8
          %s1582 = smul.addr %s1581, 128
          %s1583 = scalar_lea.hbm %s4, %s1582
          %s1584 = sshll.u32 %s1574, 4
          %s1585 = int_to_ptr.vmem [resolvable:$true] %s1584
          %1590 = dma.vmem_to_hbm [thread:$0]  %s1585, 1024, %s1583, %s1571, 256, 256, 16
        $region44: #{tpu_custom_call.1} parent=35 // pred_fallthru
          _
      $region36: #{tpu_custom_call.1} parent=5 // pred_fallthru
        _
      %p1591 = scmp.le.s32.totalorder 2, %s14
      // Predicated region
      $region45: #{tpu_custom_call.1} parent=5 // pred_check
        %p1592 = pneg %p1591
      $region46: #{tpu_custom_call.1} parent=5 // pred_check_branch
        %1594 = sbr.rel (%p1592) target = $region48
      $region47: #{tpu_custom_call.1} parent=5 // pred_region
        %s1595 = ssub.s32 %s14, 2
        // Predicated region
        $region49: #{tpu_custom_call.1} parent=47 // pred_check
          %p1596 = pneg %p132
        $region50: #{tpu_custom_call.1} parent=47 // pred_check_branch
          %1598 = sbr.rel (%p1596) target = $region52
        $region51: #{tpu_custom_call.1} parent=47 // pred_region
          %s1599 = sand.u32 %s117, 1
          %s1600 = scalar_lea.sflag [#allocation4], %s1599
          %s1601 = sand.u32 %s117, 1
          %s1602 = smul.addr %s1601, 64
          %s1603 = scalar_lea.vmem [#allocation6], %s1602
          %1604 = dma.done %s1600, 1024
        $region52: #{tpu_custom_call.1} parent=47 // pred_fallthru
          _
      $region48: #{tpu_custom_call.1} parent=5 // pred_fallthru
        _
    $region6: #{tpu_custom_call.1} parent=1 // loop_footer
      %s18 = sadd.s32 1, %s14
    $region7: #{tpu_custom_call.1} parent=1 // loop_footer_branch
      %13 = sbr.rel target = $region3
    $region8: #{tpu_custom_call.1} parent=1 // loop_exit
      _
    %1605 = vsyncpa [#allocation4], 1
    %s1606 = scalar_lea.sflag [#allocation4], 1
    %1607 = vsyncpa %s1606, 1
    %1608 = vsyncpa [#allocation5], 1
    %s1609 = scalar_lea.sflag [#allocation5], 1
    %1610 = vsyncpa %s1609, 1

</llo_original>
